<compile_context>
chip_gen: v7x
topology: tpu7x:2x2x1
jax: 0.10.0
libtpu: 0.0.40
codegen_flags: <defaults>
</compile_context>

<pallas_src>
import functools
import math

import jax
import jax.numpy as jnp
from jax.experimental import pallas as pl
from jax.experimental.pallas import tpu as pltpu


def encoder_layer_kernel(
    x_ref,      # [B*S, E]        f32 activations (batch folded into rows)
    wqkv_ref,   # [E, 3*nH*H]     bf16 packed [WQ | WK | WV]
    wo_ref,     # [nH*H, E]       bf16
    w1_ref,     # [E, F]          bf16
    w2_ref,     # [F, E]          bf16
    vec_ref,    # [8, V]          f32 rows: bqkv, bo, g1, be1, b1, b2, g2, be2
    o_ref,      # [B*S, E]        f32
    *, batch, n_heads, h_dim,
):
    eps = 1e-5
    BS, E = x_ref.shape
    B = batch
    S = BS // B
    nH, H = n_heads, h_dim
    HH = nH * H
    F = w1_ref.shape[1]
    scale = 1.0 / math.sqrt(H)

    x = x_ref[...]                                       # [B*S, E] f32
    xb = x.astype(jnp.bfloat16)                          # cast once for the MXU

    # ---- single lane-dense QKV projection (one MXU matmul, N = 3*nH*H) ----
    qkv = jnp.dot(xb, wqkv_ref[...], preferred_element_type=jnp.float32)
    qkv = (qkv + vec_ref[0:1, :3 * HH]).astype(jnp.bfloat16)   # [B*S, 3*nH*H]

    # ---- head relayout: [B*S, 3nH*H] -> q/k/v as [B*nH, S, H] --------------
    qkv = qkv.reshape(B, S, 3 * nH, H)
    qkv = jnp.transpose(qkv, (0, 2, 1, 3))               # [B, 3nH, S, H]
    q = qkv[:, :nH].reshape(B * nH, S, H)
    k = qkv[:, nH:2 * nH].reshape(B * nH, S, H)
    v = qkv[:, 2 * nH:].reshape(B * nH, S, H)

    # ---- attention: all batches & heads in one batched dot, ONE softmax ----
    s = jax.lax.dot_general(q, k, (((2,), (2,)), ((0,), (0,))),
                            preferred_element_type=jnp.float32)  # [B*nH, S, S]
    s = s * scale                                        # f32 scale (as PyTorch)
    s = s - jnp.max(s, axis=-1, keepdims=True)
    p = jnp.exp(s)
    p = p * pl.reciprocal(jnp.sum(p, axis=-1, keepdims=True), approx=True)
    oh = jax.lax.dot_general(p.astype(jnp.bfloat16), v,
                             (((2,), (1,)), ((0,), (0,))),
                             preferred_element_type=jnp.float32)  # [B*nH, S, H]

    # ---- fused output projection: one matmul with K = nH*H ----------------
    oh = oh.astype(jnp.bfloat16).reshape(B, nH, S, H)
    oh = jnp.transpose(oh, (0, 2, 1, 3)).reshape(BS, HH)          # [B*S, nH*H]
    att = jnp.dot(oh, wo_ref[...], preferred_element_type=jnp.float32)
    att = att + vec_ref[1:2, :E]                         # [B*S, E]

    # ---- LayerNorm helper: two independent reductions (sum, sum of squares)
    def layer_norm(y, g, b):
        s1 = jnp.sum(y, axis=-1, keepdims=True)
        s2 = jnp.sum(y * y, axis=-1, keepdims=True)
        mu = s1 * (1.0 / E)
        var = jnp.maximum(s2 * (1.0 / E) - mu * mu, 0.0)
        return (y - mu) * jax.lax.rsqrt(var + eps) * g + b

    # ---- residual + LayerNorm #1 (dropout = identity, eval mode) ----------
    y = layer_norm(x + att, vec_ref[2:3, :E], vec_ref[3:4, :E])

    # ---- feed-forward -------------------------------------------------------
    ff = jnp.dot(y.astype(jnp.bfloat16), w1_ref[...],
                 preferred_element_type=jnp.float32) + vec_ref[4:5, :F]
    ff = jnp.maximum(ff, 0.0)
    ff = jnp.dot(ff.astype(jnp.bfloat16), w2_ref[...],
                 preferred_element_type=jnp.float32) + vec_ref[5:6, :E]

    # ---- residual + LayerNorm #2 -------------------------------------------
    z = layer_norm(y + ff, vec_ref[6:7, :E], vec_ref[7:8, :E])

    # NOTE: for E < 128 the store is a masked partial store; at real sizes use
    # E >= 128 (or a lane-dense reshaped output) to hit unmasked vst.
    o_ref[...] = z


def encoder_layer(x, params, *, n_heads, h_dim):
    (wq, bq, wk, bk, wv, bv, wo, bo, g1, be1, w1, b1, w2, b2, g2, be2) = params
    B, S, E = x.shape
    F = w1.shape[1]
    HH = n_heads * h_dim

    # ---- host-side parameter packing (free; outside the kernel) ------------
    wqkv = jnp.concatenate([wq, wk, wv], axis=1).astype(jnp.bfloat16)  # [E,3HH]
    wob = wo.astype(jnp.bfloat16)                                      # [HH,E]
    w1b = w1.astype(jnp.bfloat16)
    w2b = w2.astype(jnp.bfloat16)

    V = max(E, F, 3 * HH)
    V = -(-V // 128) * 128          # pad packed-vector block to a lane multiple

    def pad_row(v):
        v = jnp.reshape(v, (-1,)).astype(jnp.float32)
        return jnp.pad(v, (0, V - v.shape[0]))

    bqkv = jnp.concatenate([bq, bk, bv], axis=1)                       # [1,3HH]
    vecs = jnp.stack(
        [pad_row(bqkv), pad_row(bo), pad_row(g1), pad_row(be1),
         pad_row(b1), pad_row(b2), pad_row(g2), pad_row(be2)], axis=0)  # [8, V]

    kernel = functools.partial(encoder_layer_kernel, batch=B,
                               n_heads=n_heads, h_dim=h_dim)

    x2 = x.reshape(B * S, E)        # fold batch into rows; single invocation

    vmem = lambda: pl.BlockSpec(memory_space=pltpu.MemorySpace.VMEM)
    out2 = pl.pallas_call(
        kernel,
        out_shape=jax.ShapeDtypeStruct((B * S, E), jnp.float32),
        in_specs=[vmem() for _ in range(6)],
        out_specs=vmem(),
        compiler_params=pltpu.CompilerParams(
            vmem_limit_bytes=32 * 1024 * 1024),
    )(x2, wqkv, wob, w1b, w2b, vecs)
    return out2.reshape(B, S, E)


def make_params(key, e_dim, h_dim, n_heads):
    """Deterministic synthetic parameters (shapes match the PyTorch module)."""
    HH = n_heads * h_dim
    F = e_dim // 2
    ks = jax.random.split(key, 12)
    scale = 0.05
    return [
        scale * jax.random.normal(ks[0], (e_dim, HH), jnp.float32),   # WQ
        scale * jax.random.normal(ks[1], (1, HH), jnp.float32),       # bQ
        scale * jax.random.normal(ks[2], (e_dim, HH), jnp.float32),   # WK
        scale * jax.random.normal(ks[3], (1, HH), jnp.float32),       # bK
        scale * jax.random.normal(ks[4], (e_dim, HH), jnp.float32),   # WV
        scale * jax.random.normal(ks[5], (1, HH), jnp.float32),       # bV
        scale * jax.random.normal(ks[6], (HH, e_dim), jnp.float32),   # Wo
        scale * jax.random.normal(ks[7], (1, e_dim), jnp.float32),    # bo
        jnp.ones((1, e_dim), jnp.float32),                            # a_LN gamma
        jnp.zeros((1, e_dim), jnp.float32),                           # a_LN beta
        scale * jax.random.normal(ks[8], (e_dim, F), jnp.float32),    # l1 W
        scale * jax.random.normal(ks[9], (1, F), jnp.float32),        # l1 b
        scale * jax.random.normal(ks[10], (F, e_dim), jnp.float32),   # l2 W
        scale * jax.random.normal(ks[11], (1, e_dim), jnp.float32),   # l2 b
        jnp.ones((1, e_dim), jnp.float32),                            # ff_LN gamma
        jnp.zeros((1, e_dim), jnp.float32),                           # ff_LN beta
    ]


def reference(x, params, *, n_heads, h_dim):
    """Pure-JAX f32 reference matching the PyTorch forward."""
    (wq, bq, wk, bk, wv, bv, wo, bo, g1, be1, w1, b1, w2, b2, g2, be2) = params
    q = x @ wq + bq[0]
    k = x @ wk + bk[0]
    v = x @ wv + bv[0]
    outs = []
    for h in range(n_heads):
        qh = q[..., h * h_dim:(h + 1) * h_dim]
        kh = k[..., h * h_dim:(h + 1) * h_dim]
        vh = v[..., h * h_dim:(h + 1) * h_dim]
        s = jnp.einsum("bqd,bkd->bqk", qh, kh) / math.sqrt(h_dim)
        a = jax.nn.softmax(s, axis=-1)
        outs.append(jnp.einsum("bqk,bkd->bqd", a, vh))
    att = jnp.concatenate(outs, axis=-1) @ wo + bo[0]

    def ln(y, g, b):
        mu = jnp.mean(y, axis=-1, keepdims=True)
        var = jnp.mean((y - mu) ** 2, axis=-1, keepdims=True)
        return (y - mu) * jax.lax.rsqrt(var + 1e-5) * g[0] + b[0]

    y = ln(x + att, g1, be1)
    ff = jnp.maximum(y @ w1 + b1[0], 0.0) @ w2 + b2[0]
    return ln(y + ff, g2, be2)


if __name__ == "__main__":
    B, S, E = 2, 8, 32       # batch, sequence length, e_dim
    H, NH = 16, 4            # h_dim per head, n_heads

    key = jax.random.PRNGKey(0)
    kx, kp = jax.random.split(key)
    x = jax.random.normal(kx, (B, S, E), jnp.float32)
    params = make_params(kp, E, H, NH)

    out = encoder_layer(x, params, n_heads=NH, h_dim=H)
    out = jax.block_until_ready(out)

    ref = reference(x, params, n_heads=NH, h_dim=H)
    assert out.shape == (B, S, E)
    # bf16 MXU operands + approx reciprocal -> loosen tolerance vs f32 reference.
    assert jnp.allclose(out, ref, atol=2e-2, rtol=2e-2), "mismatch vs JAX reference"

    print("KERNEL_OK")
</pallas_src>

<mosaic_0001>
module attributes {stable_mosaic.version = 11 : i64} {
  func.func @encoder_layer_kernel(%arg0: memref<16x32xf32, #tpu.memory_space<vmem>>, %arg1: memref<32x192xbf16, #tpu.memory_space<vmem>>, %arg2: memref<64x32xbf16, #tpu.memory_space<vmem>>, %arg3: memref<32x16xbf16, #tpu.memory_space<vmem>>, %arg4: memref<16x32xbf16, #tpu.memory_space<vmem>>, %arg5: memref<8x256xf32, #tpu.memory_space<vmem>>, %arg6: memref<16x32xf32, #tpu.memory_space<vmem>>) attributes {dimension_semantics = [], scalar_prefetch = 0 : i64, scratch_operands = 0 : i64, tpu.core_type = #tpu.core_type<tc>} {
    %c0 = arith.constant 0 : index
    %c0_0 = arith.constant 0 : index
    %0 = vector.load %arg0[%c0, %c0_0] : memref<16x32xf32, #tpu.memory_space<vmem>>, vector<16x32xf32>
    %1 = arith.truncf %0 : vector<16x32xf32> to vector<16x32xbf16>
    %c0_1 = arith.constant 0 : index
    %c0_2 = arith.constant 0 : index
    %2 = vector.load %arg1[%c0_1, %c0_2] : memref<32x192xbf16, #tpu.memory_space<vmem>>, vector<32x192xbf16>
    %cst = arith.constant dense<0.000000e+00> : vector<16x192xf32>
    %3 = tpu.matmul %1, %2, %cst {dimension_numbers = #tpu.dot_dimension_numbers<[1], [0], [0], [1], [0, 0, 1, 1], [], []>} : vector<16x32xbf16>, vector<32x192xbf16>, vector<16x192xf32> -> vector<16x192xf32>
    %c0_3 = arith.constant 0 : index
    %c0_4 = arith.constant 0 : index
    %4 = vector.load %arg5[%c0_3, %c0_4] : memref<8x256xf32, #tpu.memory_space<vmem>>, vector<1x192xf32>
    %5 = vector.broadcast %4 : vector<1x192xf32> to vector<16x192xf32>
    %6 = arith.addf %3, %5 : vector<16x192xf32>
    %7 = arith.truncf %6 : vector<16x192xf32> to vector<16x192xbf16>
    %8 = vector.shape_cast %7 : vector<16x192xbf16> to vector<2x8x12x16xbf16>
    %9 = tpu.transpose %8, [0, 2, 1, 3] : vector<2x8x12x16xbf16> -> vector<2x12x8x16xbf16>
    %10 = vector.extract_strided_slice %9 {offsets = [0, 0, 0, 0], sizes = [2, 4, 8, 16], strides = [1, 1, 1, 1]} : vector<2x12x8x16xbf16> to vector<2x4x8x16xbf16>
    %11 = vector.shape_cast %10 : vector<2x4x8x16xbf16> to vector<8x8x16xbf16>
    %12 = vector.extract_strided_slice %9 {offsets = [0, 4, 0, 0], sizes = [2, 4, 8, 16], strides = [1, 1, 1, 1]} : vector<2x12x8x16xbf16> to vector<2x4x8x16xbf16>
    %13 = vector.shape_cast %12 : vector<2x4x8x16xbf16> to vector<8x8x16xbf16>
    %14 = vector.extract_strided_slice %9 {offsets = [0, 8, 0, 0], sizes = [2, 4, 8, 16], strides = [1, 1, 1, 1]} : vector<2x12x8x16xbf16> to vector<2x4x8x16xbf16>
    %15 = vector.shape_cast %14 : vector<2x4x8x16xbf16> to vector<8x8x16xbf16>
    %cst_5 = arith.constant dense<0.000000e+00> : vector<8x8x8xf32>
    %16 = tpu.matmul %11, %13, %cst_5 {dimension_numbers = #tpu.dot_dimension_numbers<[2], [2], [1], [1], [0, 0, 0, 1, 1, 1], [0], [0]>} : vector<8x8x16xbf16>, vector<8x8x16xbf16>, vector<8x8x8xf32> -> vector<8x8x8xf32>
    %cst_6 = arith.constant 2.500000e-01 : f32
    %17 = vector.broadcast %cst_6 : f32 to vector<8x8x8xf32>
    %18 = arith.mulf %16, %17 : vector<8x8x8xf32>
    %cst_7 = arith.constant dense<0xFF800000> : vector<8x8xf32>
    %19 = vector.multi_reduction <maximumf>, %18, %cst_7 [2] : vector<8x8x8xf32> to vector<8x8xf32>
    %20 = vector.shape_cast %19 : vector<8x8xf32> to vector<8x8x1xf32>
    %21 = vector.broadcast %20 : vector<8x8x1xf32> to vector<8x8x8xf32>
    %22 = arith.subf %18, %21 : vector<8x8x8xf32>
    %23 = math.exp %22 : vector<8x8x8xf32>
    %cst_8 = arith.constant dense<0.000000e+00> : vector<8x8xf32>
    %24 = vector.multi_reduction <add>, %23, %cst_8 [2] : vector<8x8x8xf32> to vector<8x8xf32>
    %25 = vector.shape_cast %24 : vector<8x8xf32> to vector<8x8x1xf32>
    %26 = tpu.reciprocal %25 {approx = true} : vector<8x8x1xf32> -> vector<8x8x1xf32>
    %27 = vector.broadcast %26 : vector<8x8x1xf32> to vector<8x8x8xf32>
    %28 = arith.mulf %23, %27 : vector<8x8x8xf32>
    %29 = arith.truncf %28 : vector<8x8x8xf32> to vector<8x8x8xbf16>
    %cst_9 = arith.constant dense<0.000000e+00> : vector<8x8x16xf32>
    %30 = tpu.matmul %29, %15, %cst_9 {dimension_numbers = #tpu.dot_dimension_numbers<[2], [1], [1], [2], [0, 0, 0, 1, 1, 2], [0], [0]>} : vector<8x8x8xbf16>, vector<8x8x16xbf16>, vector<8x8x16xf32> -> vector<8x8x16xf32>
    %31 = arith.truncf %30 : vector<8x8x16xf32> to vector<8x8x16xbf16>
    %32 = vector.shape_cast %31 : vector<8x8x16xbf16> to vector<2x4x8x16xbf16>
    %33 = tpu.transpose %32, [0, 2, 1, 3] : vector<2x4x8x16xbf16> -> vector<2x8x4x16xbf16>
    %34 = vector.shape_cast %33 : vector<2x8x4x16xbf16> to vector<16x64xbf16>
    %c0_10 = arith.constant 0 : index
    %c0_11 = arith.constant 0 : index
    %35 = vector.load %arg2[%c0_10, %c0_11] : memref<64x32xbf16, #tpu.memory_space<vmem>>, vector<64x32xbf16>
    %cst_12 = arith.constant dense<0.000000e+00> : vector<16x32xf32>
    %36 = tpu.matmul %34, %35, %cst_12 {dimension_numbers = #tpu.dot_dimension_numbers<[1], [0], [0], [1], [0, 0, 1, 1], [], []>} : vector<16x64xbf16>, vector<64x32xbf16>, vector<16x32xf32> -> vector<16x32xf32>
    %c1 = arith.constant 1 : index
    %c0_13 = arith.constant 0 : index
    %37 = vector.load %arg5[%c1, %c0_13] : memref<8x256xf32, #tpu.memory_space<vmem>>, vector<1x32xf32>
    %38 = vector.broadcast %37 : vector<1x32xf32> to vector<16x32xf32>
    %39 = arith.addf %36, %38 : vector<16x32xf32>
    %40 = arith.addf %0, %39 : vector<16x32xf32>
    %c2 = arith.constant 2 : index
    %c0_14 = arith.constant 0 : index
    %41 = vector.load %arg5[%c2, %c0_14] : memref<8x256xf32, #tpu.memory_space<vmem>>, vector<1x32xf32>
    %c3 = arith.constant 3 : index
    %c0_15 = arith.constant 0 : index
    %42 = vector.load %arg5[%c3, %c0_15] : memref<8x256xf32, #tpu.memory_space<vmem>>, vector<1x32xf32>
    %cst_16 = arith.constant dense<0.000000e+00> : vector<16xf32>
    %43 = vector.multi_reduction <add>, %40, %cst_16 [1] : vector<16x32xf32> to vector<16xf32>
    %44 = vector.shape_cast %43 : vector<16xf32> to vector<16x1xf32>
    %45 = arith.mulf %40, %40 : vector<16x32xf32>
    %cst_17 = arith.constant dense<0.000000e+00> : vector<16xf32>
    %46 = vector.multi_reduction <add>, %45, %cst_17 [1] : vector<16x32xf32> to vector<16xf32>
    %47 = vector.shape_cast %46 : vector<16xf32> to vector<16x1xf32>
    %cst_18 = arith.constant 3.125000e-02 : f32
    %48 = vector.broadcast %cst_18 : f32 to vector<16x1xf32>
    %49 = arith.mulf %44, %48 : vector<16x1xf32>
    %cst_19 = arith.constant 3.125000e-02 : f32
    %50 = vector.broadcast %cst_19 : f32 to vector<16x1xf32>
    %51 = arith.mulf %47, %50 : vector<16x1xf32>
    %52 = arith.mulf %49, %49 : vector<16x1xf32>
    %53 = arith.subf %51, %52 : vector<16x1xf32>
    %cst_20 = arith.constant 0.000000e+00 : f32
    %54 = vector.broadcast %cst_20 : f32 to vector<16x1xf32>
    %55 = arith.maximumf %53, %54 : vector<16x1xf32>
    %56 = vector.broadcast %49 : vector<16x1xf32> to vector<16x32xf32>
    %57 = arith.subf %40, %56 : vector<16x32xf32>
    %cst_21 = arith.constant 9.99999974E-6 : f32
    %58 = vector.broadcast %cst_21 : f32 to vector<16x1xf32>
    %59 = arith.addf %55, %58 : vector<16x1xf32>
    %60 = math.rsqrt %59 : vector<16x1xf32>
    %61 = vector.broadcast %60 : vector<16x1xf32> to vector<16x32xf32>
    %62 = arith.mulf %57, %61 : vector<16x32xf32>
    %63 = vector.broadcast %41 : vector<1x32xf32> to vector<16x32xf32>
    %64 = arith.mulf %62, %63 : vector<16x32xf32>
    %65 = vector.broadcast %42 : vector<1x32xf32> to vector<16x32xf32>
    %66 = arith.addf %64, %65 : vector<16x32xf32>
    %67 = arith.truncf %66 : vector<16x32xf32> to vector<16x32xbf16>
    %c0_22 = arith.constant 0 : index
    %c0_23 = arith.constant 0 : index
    %68 = vector.load %arg3[%c0_22, %c0_23] : memref<32x16xbf16, #tpu.memory_space<vmem>>, vector<32x16xbf16>
    %cst_24 = arith.constant dense<0.000000e+00> : vector<16x16xf32>
    %69 = tpu.matmul %67, %68, %cst_24 {dimension_numbers = #tpu.dot_dimension_numbers<[1], [0], [0], [1], [0, 0, 1, 1], [], []>} : vector<16x32xbf16>, vector<32x16xbf16>, vector<16x16xf32> -> vector<16x16xf32>
    %c4 = arith.constant 4 : index
    %c0_25 = arith.constant 0 : index
    %70 = vector.load %arg5[%c4, %c0_25] : memref<8x256xf32, #tpu.memory_space<vmem>>, vector<1x16xf32>
    %71 = vector.broadcast %70 : vector<1x16xf32> to vector<16x16xf32>
    %72 = arith.addf %69, %71 : vector<16x16xf32>
    %cst_26 = arith.constant 0.000000e+00 : f32
    %73 = vector.broadcast %cst_26 : f32 to vector<16x16xf32>
    %74 = arith.maximumf %72, %73 : vector<16x16xf32>
    %75 = arith.truncf %74 : vector<16x16xf32> to vector<16x16xbf16>
    %c0_27 = arith.constant 0 : index
    %c0_28 = arith.constant 0 : index
    %76 = vector.load %arg4[%c0_27, %c0_28] : memref<16x32xbf16, #tpu.memory_space<vmem>>, vector<16x32xbf16>
    %cst_29 = arith.constant dense<0.000000e+00> : vector<16x32xf32>
    %77 = tpu.matmul %75, %76, %cst_29 {dimension_numbers = #tpu.dot_dimension_numbers<[1], [0], [0], [1], [0, 0, 1, 1], [], []>} : vector<16x16xbf16>, vector<16x32xbf16>, vector<16x32xf32> -> vector<16x32xf32>
    %c5 = arith.constant 5 : index
    %c0_30 = arith.constant 0 : index
    %78 = vector.load %arg5[%c5, %c0_30] : memref<8x256xf32, #tpu.memory_space<vmem>>, vector<1x32xf32>
    %79 = vector.broadcast %78 : vector<1x32xf32> to vector<16x32xf32>
    %80 = arith.addf %77, %79 : vector<16x32xf32>
    %81 = arith.addf %66, %80 : vector<16x32xf32>
    %c6 = arith.constant 6 : index
    %c0_31 = arith.constant 0 : index
    %82 = vector.load %arg5[%c6, %c0_31] : memref<8x256xf32, #tpu.memory_space<vmem>>, vector<1x32xf32>
    %c7 = arith.constant 7 : index
    %c0_32 = arith.constant 0 : index
    %83 = vector.load %arg5[%c7, %c0_32] : memref<8x256xf32, #tpu.memory_space<vmem>>, vector<1x32xf32>
    %cst_33 = arith.constant dense<0.000000e+00> : vector<16xf32>
    %84 = vector.multi_reduction <add>, %81, %cst_33 [1] : vector<16x32xf32> to vector<16xf32>
    %85 = vector.shape_cast %84 : vector<16xf32> to vector<16x1xf32>
    %86 = arith.mulf %81, %81 : vector<16x32xf32>
    %cst_34 = arith.constant dense<0.000000e+00> : vector<16xf32>
    %87 = vector.multi_reduction <add>, %86, %cst_34 [1] : vector<16x32xf32> to vector<16xf32>
    %88 = vector.shape_cast %87 : vector<16xf32> to vector<16x1xf32>
    %cst_35 = arith.constant 3.125000e-02 : f32
    %89 = vector.broadcast %cst_35 : f32 to vector<16x1xf32>
    %90 = arith.mulf %85, %89 : vector<16x1xf32>
    %cst_36 = arith.constant 3.125000e-02 : f32
    %91 = vector.broadcast %cst_36 : f32 to vector<16x1xf32>
    %92 = arith.mulf %88, %91 : vector<16x1xf32>
    %93 = arith.mulf %90, %90 : vector<16x1xf32>
    %94 = arith.subf %92, %93 : vector<16x1xf32>
    %cst_37 = arith.constant 0.000000e+00 : f32
    %95 = vector.broadcast %cst_37 : f32 to vector<16x1xf32>
    %96 = arith.maximumf %94, %95 : vector<16x1xf32>
    %97 = vector.broadcast %90 : vector<16x1xf32> to vector<16x32xf32>
    %98 = arith.subf %81, %97 : vector<16x32xf32>
    %cst_38 = arith.constant 9.99999974E-6 : f32
    %99 = vector.broadcast %cst_38 : f32 to vector<16x1xf32>
    %100 = arith.addf %96, %99 : vector<16x1xf32>
    %101 = math.rsqrt %100 : vector<16x1xf32>
    %102 = vector.broadcast %101 : vector<16x1xf32> to vector<16x32xf32>
    %103 = arith.mulf %98, %102 : vector<16x32xf32>
    %104 = vector.broadcast %82 : vector<1x32xf32> to vector<16x32xf32>
    %105 = arith.mulf %103, %104 : vector<16x32xf32>
    %106 = vector.broadcast %83 : vector<1x32xf32> to vector<16x32xf32>
    %107 = arith.addf %105, %106 : vector<16x32xf32>
    %c0_39 = arith.constant 0 : index
    %c0_40 = arith.constant 0 : index
    %108 = vector.load %arg6[%c0_39, %c0_40] : memref<16x32xf32, #tpu.memory_space<vmem>>, vector<16x32xf32>
    tpu.vector_store %arg6[%c0_39, %c0_40], %107 {strides = array<i32>} : memref<16x32xf32, #tpu.memory_space<vmem>>, vector<16x32xf32>,
    return
  }
}

</mosaic_0001>

<llo_original>
// kernel: tpu_custom_call.1
$region0: #{tpu_custom_call.1}
  #allocation0 [shape = 'u32[]', space=smem, size = 0x4, offset = 0x4, fixed_abs, tag = 'smem constant byte address 0x4 - core index']
  #allocation1 [shape = 'u32[144,128]{1,0:T(1,128)}', space=vmem, size = 0x12000, scoped, tag = 'internal scratch']
  %s0 = inlined_call_operand.vmem [shape: f32[16,32], index: 0, kind: input, shape index: {}]
  %s1 = inlined_call_operand.vmem [shape: bf16[32,192], index: 1, kind: input, shape index: {}]
  %s2 = inlined_call_operand.vmem [shape: bf16[64,32], index: 2, kind: input, shape index: {}]
  %s3 = inlined_call_operand.vmem [shape: bf16[32,16], index: 3, kind: input, shape index: {}]
  %s4 = inlined_call_operand.hbm [shape: bf16[16,32], index: 4, kind: input, shape index: {}]
  %s5 = inlined_call_operand.vmem [shape: f32[8,256], index: 5, kind: input, shape index: {}]
  %s6 = inlined_call_operand.hbm [shape: f32[16,32], index: 6, kind: output, shape index: {}]
  %s7 = sld [smem:[#allocation0]]
  $region38: #{tpu_custom_call.1} parent=0
    _
  %s9 = ssub.s32 1, %s7
  %s10 = scalar_select 0, %s9, %s7
  $region1: #{tpu_custom_call.1} parent=0
    #allocation2 [shape = 'u8[4096]{0}', space=vmem, size = 0x1000, scoped, tag = 'input window, operand 4, single buffered']
    #allocation3 [shape = 's32[1]{0}', space=sflag, size = 0x4, scoped, tag = 'scoped memory for tpu_custom_call.1']
    #allocation4 [shape = 's32[1]{0}', space=sflag, size = 0x4, scoped, tag = 'scoped memory for tpu_custom_call.1']
    #allocation5 [shape = 'u8[8192]{0}', space=vmem, size = 0x2000, scoped, tag = 'output window, operand 0, single buffered']
    %11 = vsyncpa [#allocation3], 0
    %12 = vsyncpa [#allocation4], 0
    // Predicated region
    $region2: #{tpu_custom_call.1} parent=1 // pred_check
      _
    $region3: #{tpu_custom_call.1} parent=1 // pred_check_branch
      %14 = sbr.rel (0) target = $region5
    $region4: #{tpu_custom_call.1} parent=1 // pred_region
      _
    $region5: #{tpu_custom_call.1} parent=1 // pred_fallthru
      _
    // Predicated region
    $region6: #{tpu_custom_call.1} parent=1 // pred_check
      _
    $region7: #{tpu_custom_call.1} parent=1 // pred_check_branch
      %16 = sbr.rel (0) target = $region9
    $region8: #{tpu_custom_call.1} parent=1 // pred_region
      _
    $region9: #{tpu_custom_call.1} parent=1 // pred_fallthru
      _
    // Predicated region
    $region10: #{tpu_custom_call.1} parent=1 // pred_check
      _
    $region11: #{tpu_custom_call.1} parent=1 // pred_check_branch
      %18 = sbr.rel (0) target = $region13
    $region12: #{tpu_custom_call.1} parent=1 // pred_region
      _
    $region13: #{tpu_custom_call.1} parent=1 // pred_fallthru
      _
    // Predicated region
    $region14: #{tpu_custom_call.1} parent=1 // pred_check
      _
    $region15: #{tpu_custom_call.1} parent=1 // pred_check_branch
      %20 = sbr.rel (0) target = $region17
    $region16: #{tpu_custom_call.1} parent=1 // pred_region
      _
    $region17: #{tpu_custom_call.1} parent=1 // pred_fallthru
      _
    // Predicated region
    $region18: #{tpu_custom_call.1} parent=1 // pred_check
      _
    $region19: #{tpu_custom_call.1} parent=1 // pred_check_branch
      %22 = sbr.rel (0) target = $region21
    $region20: #{tpu_custom_call.1} parent=1 // pred_region
      %s24 = ssub.s32 128, 128
      %25 = vsyncadd [#allocation3], %s24
      %s26 = sshll.u32 [#allocation2], 4
      %s27 = int_to_ptr.vmem [resolvable:$true] %s26
      %32 = dma.hbm_to_vmem [thread:$0]  %s4, 128, %s27, [#allocation3], 64, 64, 4
    $region21: #{tpu_custom_call.1} parent=1 // pred_fallthru
      _
    // Predicated region
    $region22: #{tpu_custom_call.1} parent=1 // pred_check
      _
    $region23: #{tpu_custom_call.1} parent=1 // pred_check_branch
      %34 = sbr.rel (0) target = $region25
    $region24: #{tpu_custom_call.1} parent=1 // pred_region
      _
    $region25: #{tpu_custom_call.1} parent=1 // pred_fallthru
      _
    // Predicated region
    $region26: #{tpu_custom_call.1} parent=1 // pred_check
      _
    $region27: #{tpu_custom_call.1} parent=1 // pred_check_branch
      %36 = sbr.rel (0) target = $region29
    $region28: #{tpu_custom_call.1} parent=1 // pred_region
      %37 = dma.done [#allocation3], 128
    $region29: #{tpu_custom_call.1} parent=1 // pred_fallthru
      _
    %v39 = vld [vmem:[%s0] sm:$0xff]
    %v40 = vld [vmem:[%s0 + $0x8] sm:$0xff]
    %v41 = vpack.c.bf16 %v40, %v39
    %v42 = vld [vmem:[%s1] sm:$0xff]
    %v43 = vld [vmem:[%s1 + $0x8] sm:$0xff]
    %v44 = vld [vmem:[%s1 + $0x10] sm:$0xff]
    %v45 = vld [vmem:[%s1 + $0x18] sm:$0xff]
    %v46 = vld [vmem:[%s5] ss:$8 sm:$0x3]
    %v48 = vlaneseq
    %v49 = vshrl.u32 %v48, 7
    %v50 = vsub.s32 0, %v49
    %v51 = vrot.slane %v46, %v50
    %v52 = vlaneseq
    %v53 = vshrl.u32 %v52, 7
    %v54 = vsub.s32 1, %v53
    %v55 = vrot.slane %v46, %v54
    %v62 = vunpack.c.l.b16 %v42
    %v63 = vunpack.c.h.b16 %v42
    %v64 = vunpack.c.l.b16 %v43
    %v65 = vunpack.c.h.b16 %v43
    %v66 = vunpack.c.l.b16 %v44
    %v67 = vunpack.c.h.b16 %v44
    %v68 = vunpack.c.l.b16 %v45
    %v69 = vunpack.c.h.b16 %v45
    %v70 = vpack.c.b16 %v64, %v62
    %v71 = vpack.c.b16 %v65, %v63
    %v72 = vpack.c.b16 %v68, %v66
    %v73 = vpack.c.b16 %v69, %v67
    %vm78 = vcmask 261120
    %v80 = vsel %vm78, %v41, 0
    %82 = vmatprep.subr.bf16.mxu0 %v71
    %83 = vmatpush1.bf16.msra.mxu0 %v70
    %84 = vmatprep.subr.bf16.mxu0 %v73
    %85 = vmatpush1.bf16.msra.mxu0 %v72
    %86 = vmatprep.subr.bf16.mxu0 0
    %87 = vmatpush1.bf16.msra.mxu0 0
    %88 = vmatprep.subr.bf16.mxu0 0
    %89 = vmatpush1.bf16.msra.mxu0 0
    %90 = vmatprep.subr.bf16.mxu0 0
    %91 = vmatpush1.bf16.msra.mxu0 0
    %92 = vmatprep.subr.bf16.mxu0 0
    %93 = vmatpush1.bf16.msra.mxu0 0
    %94 = vmatprep.subr.bf16.mxu0 0
    %95 = vmatpush1.bf16.msra.mxu0 0
    %96 = vmatprep.subr.bf16.mxu0 0
    %97 = vmatpush1.bf16.msra.mxu0 0
    %98 = vmatprep.subr.bf16.mxu0 0
    %99 = vmatpush1.bf16.msra.mxu0 0
    %100 = vmatprep.subr.bf16.mxu0 0
    %101 = vmatpush1.bf16.msra.mxu0 0
    %102 = vmatprep.subr.bf16.mxu0 0
    %103 = vmatpush1.bf16.msra.mxu0 0
    %104 = vmatprep.subr.bf16.mxu0 0
    %105 = vmatpush1.bf16.msra.mxu0 0
    %106 = vmatprep.subr.bf16.mxu0 0
    %107 = vmatpush1.bf16.msra.mxu0 0
    %108 = vmatprep.subr.bf16.mxu0 0
    %109 = vmatpush1.bf16.msra.mxu0 0
    %110 = vmatprep.subr.bf16.mxu0 0
    %111 = vmatpush1.bf16.msra.mxu0 0
    %112 = vmatprep.subr.bf16.mxu0 0
    %113 = vmatpush1.bf16.msra.mxu0 0
    %114 = vmatprep.mubr.bf16.mxu0 0
    %115 = vmatmul.mubr.bf16.gmra.mrb[0].mxu0 %v80
    %v116 = vpop.f32.mrb[0].mxu0
    %v117 = vadd.f32 %v51, %v116
    %v118 = vpop.f32.mrb[0].mxu0
    %v119 = vadd.f32 %v55, %v118
    %v120 = vpop.f32.mrb[0].mxu0
    %v121 = vadd.f32 %v51, %v120
    %v122 = vpop.f32.mrb[0].mxu0
    %v123 = vadd.f32 %v55, %v122
    %124 = vdwg.mxu0
    %v125 = vpack.c.bf16 %v121, %v117
    %v126 = vpack.c.bf16 %v123, %v119
    %128 = vrot.lane.b32.xlu0 %v125, 112
    %v129 = vpop.permute.xlu0 %128
    %130 = vrot.lane.b32.xlu0 %v125, 96
    %v131 = vpop.permute.xlu0 %130
    %132 = vrot.lane.b32.xlu0 %v125, 80
    %v133 = vpop.permute.xlu0 %132
    %134 = vrot.lane.b32.xlu0 %v125, 64
    %v135 = vpop.permute.xlu0 %134
    %136 = vrot.lane.b32.xlu0 %v125, 48
    %v137 = vpop.permute.xlu0 %136
    %138 = vrot.lane.b32.xlu0 %v125, 32
    %v139 = vpop.permute.xlu0 %138
    %140 = vrot.lane.b32.xlu0 %v125, 16
    %v141 = vpop.permute.xlu0 %140
    %143 = vrot.lane.b32.xlu0 %v126, 112
    %v144 = vpop.permute.xlu0 %143
    %145 = vrot.lane.b32.xlu0 %v126, 96
    %v146 = vpop.permute.xlu0 %145
    %147 = vrot.lane.b32.xlu0 %v126, 80
    %v148 = vpop.permute.xlu0 %147
    %v151 = vpack.i.b16 %v129, %v125
    %v153 = vshrl.u32 %v125, 16
    %v154 = vshrl.u32 %v129, 16
    %v155 = vpack.i.b16 %v154, %v153
    %v159 = vpack.i.b16 %v133, %v131
    %v161 = vshrl.u32 %v131, 16
    %v162 = vshrl.u32 %v133, 16
    %v163 = vpack.i.b16 %v162, %v161
    %v167 = vpack.i.b16 %v137, %v135
    %v169 = vshrl.u32 %v135, 16
    %v170 = vshrl.u32 %v137, 16
    %v171 = vpack.i.b16 %v170, %v169
    %v175 = vpack.i.b16 %v141, %v139
    %v177 = vshrl.u32 %v139, 16
    %v178 = vshrl.u32 %v141, 16
    %v179 = vpack.i.b16 %v178, %v177
    %v183 = vpack.i.b16 %v144, %v126
    %v185 = vshrl.u32 %v126, 16
    %v186 = vshrl.u32 %v144, 16
    %v187 = vpack.i.b16 %v186, %v185
    %v191 = vpack.i.b16 %v148, %v146
    %v193 = vshrl.u32 %v146, 16
    %v194 = vshrl.u32 %v148, 16
    %v195 = vpack.i.b16 %v194, %v193
    %v198 = vpack.i.b16 0, 0
    %v200 = vshrl.u32 0, 16
    %v201 = vpack.i.b16 %v200, %v200
    %v203 = vcombine.low %v151, %v167
    %v204 = vcombine.high %v151, %v167
    %v206 = vunpack.c.l.s4 1983009808
    %v207 = vunpack.c.0.s8 %v206
    %v208 = vlaneseq
    %v209 = vshrl.u32 %v208, 7
    %v210 = vsub.s32 %v207, %v209
    %v211 = vrot.slane %v203, %v210
    %v213 = vunpack.c.l.s4 1983009808
    %v214 = vunpack.c.0.s8 %v213
    %v215 = vlaneseq
    %v216 = vshrl.u32 %v215, 7
    %v217 = vsub.s32 %v214, %v216
    %v218 = vrot.slane %v204, %v217
    %v219 = vcombine.low %v159, %v175
    %v220 = vcombine.high %v159, %v175
    %v222 = vunpack.c.l.s4 1983009808
    %v223 = vunpack.c.0.s8 %v222
    %v224 = vlaneseq
    %v225 = vshrl.u32 %v224, 7
    %v226 = vsub.s32 %v223, %v225
    %v227 = vrot.slane %v219, %v226
    %v229 = vunpack.c.l.s4 1983009808
    %v230 = vunpack.c.0.s8 %v229
    %v231 = vlaneseq
    %v232 = vshrl.u32 %v231, 7
    %v233 = vsub.s32 %v230, %v232
    %v234 = vrot.slane %v220, %v233
    %v235 = vcombine.high %v183, %v198
    %v237 = vunpack.c.l.s4 1983009808
    %v238 = vunpack.c.0.s8 %v237
    %v239 = vlaneseq
    %v240 = vshrl.u32 %v239, 7
    %v241 = vsub.s32 %v238, %v240
    %v242 = vrot.slane %v183, %v241
    %v244 = vunpack.c.l.s4 1983009808
    %v245 = vunpack.c.0.s8 %v244
    %v246 = vlaneseq
    %v247 = vshrl.u32 %v246, 7
    %v248 = vsub.s32 %v245, %v247
    %v249 = vrot.slane %v235, %v248
    %v250 = vcombine.high %v191, %v198
    %v252 = vunpack.c.l.s4 1983009808
    %v253 = vunpack.c.0.s8 %v252
    %v254 = vlaneseq
    %v255 = vshrl.u32 %v254, 7
    %v256 = vsub.s32 %v253, %v255
    %v257 = vrot.slane %v191, %v256
    %v259 = vunpack.c.l.s4 1983009808
    %v260 = vunpack.c.0.s8 %v259
    %v261 = vlaneseq
    %v262 = vshrl.u32 %v261, 7
    %v263 = vsub.s32 %v260, %v262
    %v264 = vrot.slane %v250, %v263
    %v265 = vcombine.low %v211, %v227
    %v266 = vcombine.high %v211, %v227
    %v268 = vunpack.c.l.s4 1934713408
    %v269 = vunpack.c.0.s8 %v268
    %v270 = vlaneseq
    %v271 = vshrl.u32 %v270, 7
    %v272 = vsub.s32 %v269, %v271
    %v273 = vrot.slane %v265, %v272
    %v275 = vunpack.c.l.s4 1934713408
    %v276 = vunpack.c.0.s8 %v275
    %v277 = vlaneseq
    %v278 = vshrl.u32 %v277, 7
    %v279 = vsub.s32 %v276, %v278
    %v280 = vrot.slane %v266, %v279
    %v281 = vcombine.low %v218, %v234
    %v282 = vcombine.high %v218, %v234
    %v284 = vunpack.c.l.s4 1934713408
    %v285 = vunpack.c.0.s8 %v284
    %v286 = vlaneseq
    %v287 = vshrl.u32 %v286, 7
    %v288 = vsub.s32 %v285, %v287
    %v289 = vrot.slane %v281, %v288
    %v291 = vunpack.c.l.s4 1934713408
    %v292 = vunpack.c.0.s8 %v291
    %v293 = vlaneseq
    %v294 = vshrl.u32 %v293, 7
    %v295 = vsub.s32 %v292, %v294
    %v296 = vrot.slane %v282, %v295
    %v297 = vcombine.low %v242, %v257
    %v298 = vcombine.high %v242, %v257
    %v300 = vunpack.c.l.s4 1934713408
    %v301 = vunpack.c.0.s8 %v300
    %v302 = vlaneseq
    %v303 = vshrl.u32 %v302, 7
    %v304 = vsub.s32 %v301, %v303
    %v305 = vrot.slane %v297, %v304
    %v307 = vunpack.c.l.s4 1934713408
    %v308 = vunpack.c.0.s8 %v307
    %v309 = vlaneseq
    %v310 = vshrl.u32 %v309, 7
    %v311 = vsub.s32 %v308, %v310
    %v312 = vrot.slane %v298, %v311
    %v313 = vcombine.low %v249, %v264
    %v314 = vcombine.high %v249, %v264
    %v316 = vunpack.c.l.s4 1934713408
    %v317 = vunpack.c.0.s8 %v316
    %v318 = vlaneseq
    %v319 = vshrl.u32 %v318, 7
    %v320 = vsub.s32 %v317, %v319
    %v321 = vrot.slane %v313, %v320
    %v323 = vunpack.c.l.s4 1934713408
    %v324 = vunpack.c.0.s8 %v323
    %v325 = vlaneseq
    %v326 = vshrl.u32 %v325, 7
    %v327 = vsub.s32 %v324, %v326
    %v328 = vrot.slane %v314, %v327
    %v329 = vcombine.low %v273, %v305
    %v330 = vcombine.high %v273, %v305
    %v331 = vcombine.low %v280, %v312
    %v332 = vcombine.high %v280, %v312
    %v333 = vcombine.low %v289, %v321
    %v334 = vcombine.high %v289, %v321
    %v335 = vcombine.low %v296, %v328
    %v336 = vcombine.high %v296, %v328
    %v337 = vcombine.low %v155, %v171
    %v338 = vcombine.high %v155, %v171
    %v340 = vunpack.c.l.s4 1983009808
    %v341 = vunpack.c.0.s8 %v340
    %v342 = vlaneseq
    %v343 = vshrl.u32 %v342, 7
    %v344 = vsub.s32 %v341, %v343
    %v345 = vrot.slane %v337, %v344
    %v347 = vunpack.c.l.s4 1983009808
    %v348 = vunpack.c.0.s8 %v347
    %v349 = vlaneseq
    %v350 = vshrl.u32 %v349, 7
    %v351 = vsub.s32 %v348, %v350
    %v352 = vrot.slane %v338, %v351
    %v353 = vcombine.low %v163, %v179
    %v354 = vcombine.high %v163, %v179
    %v356 = vunpack.c.l.s4 1983009808
    %v357 = vunpack.c.0.s8 %v356
    %v358 = vlaneseq
    %v359 = vshrl.u32 %v358, 7
    %v360 = vsub.s32 %v357, %v359
    %v361 = vrot.slane %v353, %v360
    %v363 = vunpack.c.l.s4 1983009808
    %v364 = vunpack.c.0.s8 %v363
    %v365 = vlaneseq
    %v366 = vshrl.u32 %v365, 7
    %v367 = vsub.s32 %v364, %v366
    %v368 = vrot.slane %v354, %v367
    %v369 = vcombine.high %v187, %v201
    %v371 = vunpack.c.l.s4 1983009808
    %v372 = vunpack.c.0.s8 %v371
    %v373 = vlaneseq
    %v374 = vshrl.u32 %v373, 7
    %v375 = vsub.s32 %v372, %v374
    %v376 = vrot.slane %v187, %v375
    %v378 = vunpack.c.l.s4 1983009808
    %v379 = vunpack.c.0.s8 %v378
    %v380 = vlaneseq
    %v381 = vshrl.u32 %v380, 7
    %v382 = vsub.s32 %v379, %v381
    %v383 = vrot.slane %v369, %v382
    %v384 = vcombine.high %v195, %v201
    %v386 = vunpack.c.l.s4 1983009808
    %v387 = vunpack.c.0.s8 %v386
    %v388 = vlaneseq
    %v389 = vshrl.u32 %v388, 7
    %v390 = vsub.s32 %v387, %v389
    %v391 = vrot.slane %v195, %v390
    %v393 = vunpack.c.l.s4 1983009808
    %v394 = vunpack.c.0.s8 %v393
    %v395 = vlaneseq
    %v396 = vshrl.u32 %v395, 7
    %v397 = vsub.s32 %v394, %v396
    %v398 = vrot.slane %v384, %v397
    %v399 = vcombine.low %v345, %v361
    %v400 = vcombine.high %v345, %v361
    %v402 = vunpack.c.l.s4 1934713408
    %v403 = vunpack.c.0.s8 %v402
    %v404 = vlaneseq
    %v405 = vshrl.u32 %v404, 7
    %v406 = vsub.s32 %v403, %v405
    %v407 = vrot.slane %v399, %v406
    %v409 = vunpack.c.l.s4 1934713408
    %v410 = vunpack.c.0.s8 %v409
    %v411 = vlaneseq
    %v412 = vshrl.u32 %v411, 7
    %v413 = vsub.s32 %v410, %v412
    %v414 = vrot.slane %v400, %v413
    %v415 = vcombine.low %v352, %v368
    %v416 = vcombine.high %v352, %v368
    %v418 = vunpack.c.l.s4 1934713408
    %v419 = vunpack.c.0.s8 %v418
    %v420 = vlaneseq
    %v421 = vshrl.u32 %v420, 7
    %v422 = vsub.s32 %v419, %v421
    %v423 = vrot.slane %v415, %v422
    %v425 = vunpack.c.l.s4 1934713408
    %v426 = vunpack.c.0.s8 %v425
    %v427 = vlaneseq
    %v428 = vshrl.u32 %v427, 7
    %v429 = vsub.s32 %v426, %v428
    %v430 = vrot.slane %v416, %v429
    %v431 = vcombine.low %v376, %v391
    %v432 = vcombine.high %v376, %v391
    %v434 = vunpack.c.l.s4 1934713408
    %v435 = vunpack.c.0.s8 %v434
    %v436 = vlaneseq
    %v437 = vshrl.u32 %v436, 7
    %v438 = vsub.s32 %v435, %v437
    %v439 = vrot.slane %v431, %v438
    %v441 = vunpack.c.l.s4 1934713408
    %v442 = vunpack.c.0.s8 %v441
    %v443 = vlaneseq
    %v444 = vshrl.u32 %v443, 7
    %v445 = vsub.s32 %v442, %v444
    %v446 = vrot.slane %v432, %v445
    %v447 = vcombine.low %v383, %v398
    %v448 = vcombine.high %v383, %v398
    %v450 = vunpack.c.l.s4 1934713408
    %v451 = vunpack.c.0.s8 %v450
    %v452 = vlaneseq
    %v453 = vshrl.u32 %v452, 7
    %v454 = vsub.s32 %v451, %v453
    %v455 = vrot.slane %v447, %v454
    %v457 = vunpack.c.l.s4 1934713408
    %v458 = vunpack.c.0.s8 %v457
    %v459 = vlaneseq
    %v460 = vshrl.u32 %v459, 7
    %v461 = vsub.s32 %v458, %v460
    %v462 = vrot.slane %v448, %v461
    %v463 = vcombine.low %v407, %v439
    %v464 = vcombine.high %v407, %v439
    %v465 = vcombine.low %v414, %v446
    %v466 = vcombine.high %v414, %v446
    %v467 = vcombine.low %v423, %v455
    %v468 = vcombine.high %v423, %v455
    %v469 = vcombine.low %v430, %v462
    %v470 = vcombine.high %v430, %v462
    %v471 = vcombine.low %v329, %v331
    %v472 = vcombine.high %v329, %v331
    %v474 = vunpack.c.l.s4 1983009808
    %v475 = vunpack.c.0.s8 %v474
    %v476 = vlaneseq
    %v477 = vshrl.u32 %v476, 7
    %v478 = vsub.s32 %v475, %v477
    %v479 = vrot.slane %v471, %v478
    %v481 = vunpack.c.l.s4 1983009808
    %v482 = vunpack.c.0.s8 %v481
    %v483 = vlaneseq
    %v484 = vshrl.u32 %v483, 7
    %v485 = vsub.s32 %v482, %v484
    %v486 = vrot.slane %v472, %v485
    %v487 = vcombine.low %v330, %v332
    %v488 = vcombine.high %v330, %v332
    %v490 = vunpack.c.l.s4 1983009808
    %v491 = vunpack.c.0.s8 %v490
    %v492 = vlaneseq
    %v493 = vshrl.u32 %v492, 7
    %v494 = vsub.s32 %v491, %v493
    %v495 = vrot.slane %v487, %v494
    %v497 = vunpack.c.l.s4 1983009808
    %v498 = vunpack.c.0.s8 %v497
    %v499 = vlaneseq
    %v500 = vshrl.u32 %v499, 7
    %v501 = vsub.s32 %v498, %v500
    %v502 = vrot.slane %v488, %v501
    %v503 = vcombine.low %v479, %v495
    %v504 = vcombine.high %v479, %v495
    %v506 = vunpack.c.l.s4 1934713408
    %v507 = vunpack.c.0.s8 %v506
    %v508 = vlaneseq
    %v509 = vshrl.u32 %v508, 7
    %v510 = vsub.s32 %v507, %v509
    %v511 = vrot.slane %v503, %v510
    %v513 = vunpack.c.l.s4 1934713408
    %v514 = vunpack.c.0.s8 %v513
    %v515 = vlaneseq
    %v516 = vshrl.u32 %v515, 7
    %v517 = vsub.s32 %v514, %v516
    %v518 = vrot.slane %v504, %v517
    %v519 = vcombine.low %v486, %v502
    %v521 = vunpack.c.l.s4 1934713408
    %v522 = vunpack.c.0.s8 %v521
    %v523 = vlaneseq
    %v524 = vshrl.u32 %v523, 7
    %v525 = vsub.s32 %v522, %v524
    %v526 = vrot.slane %v519, %v525
    %v527 = vcombine.high %v511, 0
    %v528 = vcombine.high %v518, 0
    %v529 = vcombine.high %v526, 0
    %v530 = vcombine.low %v463, %v465
    %v531 = vcombine.high %v463, %v465
    %v533 = vunpack.c.l.s4 1983009808
    %v534 = vunpack.c.0.s8 %v533
    %v535 = vlaneseq
    %v536 = vshrl.u32 %v535, 7
    %v537 = vsub.s32 %v534, %v536
    %v538 = vrot.slane %v530, %v537
    %v540 = vunpack.c.l.s4 1983009808
    %v541 = vunpack.c.0.s8 %v540
    %v542 = vlaneseq
    %v543 = vshrl.u32 %v542, 7
    %v544 = vsub.s32 %v541, %v543
    %v545 = vrot.slane %v531, %v544
    %v546 = vcombine.low %v464, %v466
    %v547 = vcombine.high %v464, %v466
    %v549 = vunpack.c.l.s4 1983009808
    %v550 = vunpack.c.0.s8 %v549
    %v551 = vlaneseq
    %v552 = vshrl.u32 %v551, 7
    %v553 = vsub.s32 %v550, %v552
    %v554 = vrot.slane %v546, %v553
    %v556 = vunpack.c.l.s4 1983009808
    %v557 = vunpack.c.0.s8 %v556
    %v558 = vlaneseq
    %v559 = vshrl.u32 %v558, 7
    %v560 = vsub.s32 %v557, %v559
    %v561 = vrot.slane %v547, %v560
    %v562 = vcombine.low %v538, %v554
    %v563 = vcombine.high %v538, %v554
    %v565 = vunpack.c.l.s4 1934713408
    %v566 = vunpack.c.0.s8 %v565
    %v567 = vlaneseq
    %v568 = vshrl.u32 %v567, 7
    %v569 = vsub.s32 %v566, %v568
    %v570 = vrot.slane %v562, %v569
    %v572 = vunpack.c.l.s4 1934713408
    %v573 = vunpack.c.0.s8 %v572
    %v574 = vlaneseq
    %v575 = vshrl.u32 %v574, 7
    %v576 = vsub.s32 %v573, %v575
    %v577 = vrot.slane %v563, %v576
    %v578 = vcombine.low %v545, %v561
    %v580 = vunpack.c.l.s4 1934713408
    %v581 = vunpack.c.0.s8 %v580
    %v582 = vlaneseq
    %v583 = vshrl.u32 %v582, 7
    %v584 = vsub.s32 %v581, %v583
    %v585 = vrot.slane %v578, %v584
    %v586 = vcombine.high %v570, 0
    %v587 = vcombine.high %v577, 0
    %v588 = vcombine.high %v585, 0
    %v589 = vcombine.low %v333, %v335
    %v590 = vcombine.high %v333, %v335
    %v592 = vunpack.c.l.s4 1983009808
    %v593 = vunpack.c.0.s8 %v592
    %v594 = vlaneseq
    %v595 = vshrl.u32 %v594, 7
    %v596 = vsub.s32 %v593, %v595
    %v597 = vrot.slane %v589, %v596
    %v599 = vunpack.c.l.s4 1983009808
    %v600 = vunpack.c.0.s8 %v599
    %v601 = vlaneseq
    %v602 = vshrl.u32 %v601, 7
    %v603 = vsub.s32 %v600, %v602
    %v604 = vrot.slane %v590, %v603
    %v605 = vcombine.low %v334, %v336
    %v606 = vcombine.high %v334, %v336
    %v608 = vunpack.c.l.s4 1983009808
    %v609 = vunpack.c.0.s8 %v608
    %v610 = vlaneseq
    %v611 = vshrl.u32 %v610, 7
    %v612 = vsub.s32 %v609, %v611
    %v613 = vrot.slane %v605, %v612
    %v615 = vunpack.c.l.s4 1983009808
    %v616 = vunpack.c.0.s8 %v615
    %v617 = vlaneseq
    %v618 = vshrl.u32 %v617, 7
    %v619 = vsub.s32 %v616, %v618
    %v620 = vrot.slane %v606, %v619
    %v621 = vcombine.low %v597, %v613
    %v622 = vcombine.high %v597, %v613
    %v624 = vunpack.c.l.s4 1934713408
    %v625 = vunpack.c.0.s8 %v624
    %v626 = vlaneseq
    %v627 = vshrl.u32 %v626, 7
    %v628 = vsub.s32 %v625, %v627
    %v629 = vrot.slane %v621, %v628
    %v631 = vunpack.c.l.s4 1934713408
    %v632 = vunpack.c.0.s8 %v631
    %v633 = vlaneseq
    %v634 = vshrl.u32 %v633, 7
    %v635 = vsub.s32 %v632, %v634
    %v636 = vrot.slane %v622, %v635
    %v637 = vcombine.low %v604, %v620
    %v639 = vunpack.c.l.s4 1934713408
    %v640 = vunpack.c.0.s8 %v639
    %v641 = vlaneseq
    %v642 = vshrl.u32 %v641, 7
    %v643 = vsub.s32 %v640, %v642
    %v644 = vrot.slane %v637, %v643
    %v645 = vcombine.high %v629, 0
    %v646 = vcombine.high %v636, 0
    %v647 = vcombine.high %v644, 0
    %v648 = vcombine.low %v467, %v469
    %v649 = vcombine.high %v467, %v469
    %v651 = vunpack.c.l.s4 1983009808
    %v652 = vunpack.c.0.s8 %v651
    %v653 = vlaneseq
    %v654 = vshrl.u32 %v653, 7
    %v655 = vsub.s32 %v652, %v654
    %v656 = vrot.slane %v648, %v655
    %v658 = vunpack.c.l.s4 1983009808
    %v659 = vunpack.c.0.s8 %v658
    %v660 = vlaneseq
    %v661 = vshrl.u32 %v660, 7
    %v662 = vsub.s32 %v659, %v661
    %v663 = vrot.slane %v649, %v662
    %v664 = vcombine.low %v468, %v470
    %v665 = vcombine.high %v468, %v470
    %v667 = vunpack.c.l.s4 1983009808
    %v668 = vunpack.c.0.s8 %v667
    %v669 = vlaneseq
    %v670 = vshrl.u32 %v669, 7
    %v671 = vsub.s32 %v668, %v670
    %v672 = vrot.slane %v664, %v671
    %v674 = vunpack.c.l.s4 1983009808
    %v675 = vunpack.c.0.s8 %v674
    %v676 = vlaneseq
    %v677 = vshrl.u32 %v676, 7
    %v678 = vsub.s32 %v675, %v677
    %v679 = vrot.slane %v665, %v678
    %v680 = vcombine.low %v656, %v672
    %v681 = vcombine.high %v656, %v672
    %v683 = vunpack.c.l.s4 1934713408
    %v684 = vunpack.c.0.s8 %v683
    %v685 = vlaneseq
    %v686 = vshrl.u32 %v685, 7
    %v687 = vsub.s32 %v684, %v686
    %v688 = vrot.slane %v680, %v687
    %v690 = vunpack.c.l.s4 1934713408
    %v691 = vunpack.c.0.s8 %v690
    %v692 = vlaneseq
    %v693 = vshrl.u32 %v692, 7
    %v694 = vsub.s32 %v691, %v693
    %v695 = vrot.slane %v681, %v694
    %v696 = vcombine.low %v663, %v679
    %v698 = vunpack.c.l.s4 1934713408
    %v699 = vunpack.c.0.s8 %v698
    %v700 = vlaneseq
    %v701 = vshrl.u32 %v700, 7
    %v702 = vsub.s32 %v699, %v701
    %v703 = vrot.slane %v696, %v702
    %v704 = vcombine.high %v688, 0
    %v705 = vcombine.high %v695, 0
    %v706 = vcombine.high %v703, 0
    %v709 = vpack.i.b16 %v570, %v511
    %v710 = vshrl.u32 %v511, 16
    %v711 = vshrl.u32 %v570, 16
    %v712 = vpack.i.b16 %v711, %v710
    %v715 = vpack.i.b16 %v586, %v527
    %v716 = vshrl.u32 %v527, 16
    %v717 = vshrl.u32 %v586, 16
    %v718 = vpack.i.b16 %v717, %v716
    %v721 = vpack.i.b16 %v577, %v518
    %v722 = vshrl.u32 %v518, 16
    %v723 = vshrl.u32 %v577, 16
    %v724 = vpack.i.b16 %v723, %v722
    %v727 = vpack.i.b16 %v587, %v528
    %v728 = vshrl.u32 %v528, 16
    %v729 = vshrl.u32 %v587, 16
    %v730 = vpack.i.b16 %v729, %v728
    %v733 = vpack.i.b16 %v585, %v526
    %v734 = vshrl.u32 %v526, 16
    %v735 = vshrl.u32 %v585, 16
    %v736 = vpack.i.b16 %v735, %v734
    %v739 = vpack.i.b16 %v588, %v529
    %v740 = vshrl.u32 %v529, 16
    %v741 = vshrl.u32 %v588, 16
    %v742 = vpack.i.b16 %v741, %v740
    %v745 = vpack.i.b16 %v688, %v629
    %v746 = vshrl.u32 %v629, 16
    %v747 = vshrl.u32 %v688, 16
    %v748 = vpack.i.b16 %v747, %v746
    %v751 = vpack.i.b16 %v704, %v645
    %v752 = vshrl.u32 %v645, 16
    %v753 = vshrl.u32 %v704, 16
    %v754 = vpack.i.b16 %v753, %v752
    %v757 = vpack.i.b16 %v695, %v636
    %v758 = vshrl.u32 %v636, 16
    %v759 = vshrl.u32 %v695, 16
    %v760 = vpack.i.b16 %v759, %v758
    %v763 = vpack.i.b16 %v705, %v646
    %v764 = vshrl.u32 %v646, 16
    %v765 = vshrl.u32 %v705, 16
    %v766 = vpack.i.b16 %v765, %v764
    %v769 = vpack.i.b16 %v703, %v644
    %v770 = vshrl.u32 %v644, 16
    %v771 = vshrl.u32 %v703, 16
    %v772 = vpack.i.b16 %v771, %v770
    %v775 = vpack.i.b16 %v706, %v647
    %v776 = vshrl.u32 %v647, 16
    %v777 = vshrl.u32 %v706, 16
    %v778 = vpack.i.b16 %v777, %v776
    %vm779 = vcmask 130048
    %v781 = vsel %vm779, %v709, 0
    %v784 = vsel %vm779, %v721, 0
    %786 = vmatprep.subr.bf16.mxu0 0
    %787 = vmatpush1.bf16.xpose.msra.mxu0 %v784
    %788 = vmatprep.subr.bf16.mxu0 0
    %789 = vmatpush1.bf16.xpose.msra.mxu0 0
    %790 = vmatprep.subr.bf16.mxu0 0
    %791 = vmatpush1.bf16.xpose.msra.mxu0 0
    %792 = vmatprep.subr.bf16.mxu0 0
    %793 = vmatpush1.bf16.xpose.msra.mxu0 0
    %794 = vmatprep.subr.bf16.mxu0 0
    %795 = vmatpush1.bf16.xpose.msra.mxu0 0
    %796 = vmatprep.subr.bf16.mxu0 0
    %797 = vmatpush1.bf16.xpose.msra.mxu0 0
    %798 = vmatprep.subr.bf16.mxu0 0
    %799 = vmatpush1.bf16.xpose.msra.mxu0 0
    %800 = vmatprep.subr.bf16.mxu0 0
    %801 = vmatpush1.bf16.xpose.msra.mxu0 0
    %802 = vmatprep.subr.bf16.mxu0 0
    %803 = vmatpush1.bf16.xpose.msra.mxu0 0
    %804 = vmatprep.subr.bf16.mxu0 0
    %805 = vmatpush1.bf16.xpose.msra.mxu0 0
    %806 = vmatprep.subr.bf16.mxu0 0
    %807 = vmatpush1.bf16.xpose.msra.mxu0 0
    %808 = vmatprep.subr.bf16.mxu0 0
    %809 = vmatpush1.bf16.xpose.msra.mxu0 0
    %810 = vmatprep.subr.bf16.mxu0 0
    %811 = vmatpush1.bf16.xpose.msra.mxu0 0
    %812 = vmatprep.subr.bf16.mxu0 0
    %813 = vmatpush1.bf16.xpose.msra.mxu0 0
    %814 = vmatprep.subr.bf16.mxu0 0
    %815 = vmatpush1.bf16.xpose.msra.mxu0 0
    %816 = vmatprep.subr.bf16.mxu0 0
    %817 = vmatpush1.bf16.xpose.msra.mxu0 0
    %818 = vmatprep.mubr.bf16.mxu0 0
    %819 = vmatmul.mubr.bf16.gmra.mrb[0].mxu0 %v781
    %v820 = vpop.f32.mrb[0].mxu0
    %v821 = vadd.f32 0.0, %v820
    %v822 = vpop.f32.mrb[0].mxu0
    %v823 = vpop.f32.mrb[0].mxu0
    %v824 = vpop.f32.mrb[0].mxu0
    %825 = vdwg.mxu0
    %v827 = vsel %vm779, %v712, 0
    %v830 = vsel %vm779, %v724, 0
    %832 = vmatprep.subr.bf16.mxu0 0
    %833 = vmatpush1.bf16.xpose.msra.mxu0 %v830
    %834 = vmatprep.subr.bf16.mxu0 0
    %835 = vmatpush1.bf16.xpose.msra.mxu0 0
    %836 = vmatprep.subr.bf16.mxu0 0
    %837 = vmatpush1.bf16.xpose.msra.mxu0 0
    %838 = vmatprep.subr.bf16.mxu0 0
    %839 = vmatpush1.bf16.xpose.msra.mxu0 0
    %840 = vmatprep.subr.bf16.mxu0 0
    %841 = vmatpush1.bf16.xpose.msra.mxu0 0
    %842 = vmatprep.subr.bf16.mxu0 0
    %843 = vmatpush1.bf16.xpose.msra.mxu0 0
    %844 = vmatprep.subr.bf16.mxu0 0
    %845 = vmatpush1.bf16.xpose.msra.mxu0 0
    %846 = vmatprep.subr.bf16.mxu0 0
    %847 = vmatpush1.bf16.xpose.msra.mxu0 0
    %848 = vmatprep.subr.bf16.mxu0 0
    %849 = vmatpush1.bf16.xpose.msra.mxu0 0
    %850 = vmatprep.subr.bf16.mxu0 0
    %851 = vmatpush1.bf16.xpose.msra.mxu0 0
    %852 = vmatprep.subr.bf16.mxu0 0
    %853 = vmatpush1.bf16.xpose.msra.mxu0 0
    %854 = vmatprep.subr.bf16.mxu0 0
    %855 = vmatpush1.bf16.xpose.msra.mxu0 0
    %856 = vmatprep.subr.bf16.mxu0 0
    %857 = vmatpush1.bf16.xpose.msra.mxu0 0
    %858 = vmatprep.subr.bf16.mxu0 0
    %859 = vmatpush1.bf16.xpose.msra.mxu0 0
    %860 = vmatprep.subr.bf16.mxu0 0
    %861 = vmatpush1.bf16.xpose.msra.mxu0 0
    %862 = vmatprep.subr.bf16.mxu0 0
    %863 = vmatpush1.bf16.xpose.msra.mxu0 0
    %864 = vmatprep.mubr.bf16.mxu0 0
    %865 = vmatmul.mubr.bf16.gmra.mrb[0].mxu0 %v827
    %v866 = vpop.f32.mrb[0].mxu0
    %v867 = vadd.f32 0.0, %v866
    %v868 = vpop.f32.mrb[0].mxu0
    %v869 = vpop.f32.mrb[0].mxu0
    %v870 = vpop.f32.mrb[0].mxu0
    %871 = vdwg.mxu0
    %v873 = vsel %vm779, %v715, 0
    %v876 = vsel %vm779, %v727, 0
    %878 = vmatprep.subr.bf16.mxu0 0
    %879 = vmatpush1.bf16.xpose.msra.mxu0 %v876
    %880 = vmatprep.subr.bf16.mxu0 0
    %881 = vmatpush1.bf16.xpose.msra.mxu0 0
    %882 = vmatprep.subr.bf16.mxu0 0
    %883 = vmatpush1.bf16.xpose.msra.mxu0 0
    %884 = vmatprep.subr.bf16.mxu0 0
    %885 = vmatpush1.bf16.xpose.msra.mxu0 0
    %886 = vmatprep.subr.bf16.mxu0 0
    %887 = vmatpush1.bf16.xpose.msra.mxu0 0
    %888 = vmatprep.subr.bf16.mxu0 0
    %889 = vmatpush1.bf16.xpose.msra.mxu0 0
    %890 = vmatprep.subr.bf16.mxu0 0
    %891 = vmatpush1.bf16.xpose.msra.mxu0 0
    %892 = vmatprep.subr.bf16.mxu0 0
    %893 = vmatpush1.bf16.xpose.msra.mxu0 0
    %894 = vmatprep.subr.bf16.mxu0 0
    %895 = vmatpush1.bf16.xpose.msra.mxu0 0
    %896 = vmatprep.subr.bf16.mxu0 0
    %897 = vmatpush1.bf16.xpose.msra.mxu0 0
    %898 = vmatprep.subr.bf16.mxu0 0
    %899 = vmatpush1.bf16.xpose.msra.mxu0 0
    %900 = vmatprep.subr.bf16.mxu0 0
    %901 = vmatpush1.bf16.xpose.msra.mxu0 0
    %902 = vmatprep.subr.bf16.mxu0 0
    %903 = vmatpush1.bf16.xpose.msra.mxu0 0
    %904 = vmatprep.subr.bf16.mxu0 0
    %905 = vmatpush1.bf16.xpose.msra.mxu0 0
    %906 = vmatprep.subr.bf16.mxu0 0
    %907 = vmatpush1.bf16.xpose.msra.mxu0 0
    %908 = vmatprep.subr.bf16.mxu0 0
    %909 = vmatpush1.bf16.xpose.msra.mxu0 0
    %910 = vmatprep.mubr.bf16.mxu0 0
    %911 = vmatmul.mubr.bf16.gmra.mrb[0].mxu0 %v873
    %v912 = vpop.f32.mrb[0].mxu0
    %v913 = vadd.f32 0.0, %v912
    %v914 = vpop.f32.mrb[0].mxu0
    %v915 = vpop.f32.mrb[0].mxu0
    %v916 = vpop.f32.mrb[0].mxu0
    %917 = vdwg.mxu0
    %v919 = vsel %vm779, %v718, 0
    %v922 = vsel %vm779, %v730, 0
    %924 = vmatprep.subr.bf16.mxu0 0
    %925 = vmatpush1.bf16.xpose.msra.mxu0 %v922
    %926 = vmatprep.subr.bf16.mxu0 0
    %927 = vmatpush1.bf16.xpose.msra.mxu0 0
    %928 = vmatprep.subr.bf16.mxu0 0
    %929 = vmatpush1.bf16.xpose.msra.mxu0 0
    %930 = vmatprep.subr.bf16.mxu0 0
    %931 = vmatpush1.bf16.xpose.msra.mxu0 0
    %932 = vmatprep.subr.bf16.mxu0 0
    %933 = vmatpush1.bf16.xpose.msra.mxu0 0
    %934 = vmatprep.subr.bf16.mxu0 0
    %935 = vmatpush1.bf16.xpose.msra.mxu0 0
    %936 = vmatprep.subr.bf16.mxu0 0
    %937 = vmatpush1.bf16.xpose.msra.mxu0 0
    %938 = vmatprep.subr.bf16.mxu0 0
    %939 = vmatpush1.bf16.xpose.msra.mxu0 0
    %940 = vmatprep.subr.bf16.mxu0 0
    %941 = vmatpush1.bf16.xpose.msra.mxu0 0
    %942 = vmatprep.subr.bf16.mxu0 0
    %943 = vmatpush1.bf16.xpose.msra.mxu0 0
    %944 = vmatprep.subr.bf16.mxu0 0
    %945 = vmatpush1.bf16.xpose.msra.mxu0 0
    %946 = vmatprep.subr.bf16.mxu0 0
    %947 = vmatpush1.bf16.xpose.msra.mxu0 0
    %948 = vmatprep.subr.bf16.mxu0 0
    %949 = vmatpush1.bf16.xpose.msra.mxu0 0
    %950 = vmatprep.subr.bf16.mxu0 0
    %951 = vmatpush1.bf16.xpose.msra.mxu0 0
    %952 = vmatprep.subr.bf16.mxu0 0
    %953 = vmatpush1.bf16.xpose.msra.mxu0 0
    %954 = vmatprep.subr.bf16.mxu0 0
    %955 = vmatpush1.bf16.xpose.msra.mxu0 0
    %956 = vmatprep.mubr.bf16.mxu0 0
    %957 = vmatmul.mubr.bf16.gmra.mrb[0].mxu0 %v919
    %v958 = vpop.f32.mrb[0].mxu0
    %v959 = vadd.f32 0.0, %v958
    %v960 = vpop.f32.mrb[0].mxu0
    %v961 = vpop.f32.mrb[0].mxu0
    %v962 = vpop.f32.mrb[0].mxu0
    %963 = vdwg.mxu0
    %v965 = vsel %vm779, %v745, 0
    %v968 = vsel %vm779, %v757, 0
    %970 = vmatprep.subr.bf16.mxu0 0
    %971 = vmatpush1.bf16.xpose.msra.mxu0 %v968
    %972 = vmatprep.subr.bf16.mxu0 0
    %973 = vmatpush1.bf16.xpose.msra.mxu0 0
    %974 = vmatprep.subr.bf16.mxu0 0
    %975 = vmatpush1.bf16.xpose.msra.mxu0 0
    %976 = vmatprep.subr.bf16.mxu0 0
    %977 = vmatpush1.bf16.xpose.msra.mxu0 0
    %978 = vmatprep.subr.bf16.mxu0 0
    %979 = vmatpush1.bf16.xpose.msra.mxu0 0
    %980 = vmatprep.subr.bf16.mxu0 0
    %981 = vmatpush1.bf16.xpose.msra.mxu0 0
    %982 = vmatprep.subr.bf16.mxu0 0
    %983 = vmatpush1.bf16.xpose.msra.mxu0 0
    %984 = vmatprep.subr.bf16.mxu0 0
    %985 = vmatpush1.bf16.xpose.msra.mxu0 0
    %986 = vmatprep.subr.bf16.mxu0 0
    %987 = vmatpush1.bf16.xpose.msra.mxu0 0
    %988 = vmatprep.subr.bf16.mxu0 0
    %989 = vmatpush1.bf16.xpose.msra.mxu0 0
    %990 = vmatprep.subr.bf16.mxu0 0
    %991 = vmatpush1.bf16.xpose.msra.mxu0 0
    %992 = vmatprep.subr.bf16.mxu0 0
    %993 = vmatpush1.bf16.xpose.msra.mxu0 0
    %994 = vmatprep.subr.bf16.mxu0 0
    %995 = vmatpush1.bf16.xpose.msra.mxu0 0
    %996 = vmatprep.subr.bf16.mxu0 0
    %997 = vmatpush1.bf16.xpose.msra.mxu0 0
    %998 = vmatprep.subr.bf16.mxu0 0
    %999 = vmatpush1.bf16.xpose.msra.mxu0 0
    %1000 = vmatprep.subr.bf16.mxu0 0
    %1001 = vmatpush1.bf16.xpose.msra.mxu0 0
    %1002 = vmatprep.mubr.bf16.mxu0 0
    %1003 = vmatmul.mubr.bf16.gmra.mrb[0].mxu0 %v965
    %v1004 = vpop.f32.mrb[0].mxu0
    %v1005 = vadd.f32 0.0, %v1004
    %v1006 = vpop.f32.mrb[0].mxu0
    %v1007 = vpop.f32.mrb[0].mxu0
    %v1008 = vpop.f32.mrb[0].mxu0
    %1009 = vdwg.mxu0
    %v1011 = vsel %vm779, %v748, 0
    %v1014 = vsel %vm779, %v760, 0
    %1016 = vmatprep.subr.bf16.mxu0 0
    %1017 = vmatpush1.bf16.xpose.msra.mxu0 %v1014
    %1018 = vmatprep.subr.bf16.mxu0 0
    %1019 = vmatpush1.bf16.xpose.msra.mxu0 0
    %1020 = vmatprep.subr.bf16.mxu0 0
    %1021 = vmatpush1.bf16.xpose.msra.mxu0 0
    %1022 = vmatprep.subr.bf16.mxu0 0
    %1023 = vmatpush1.bf16.xpose.msra.mxu0 0
    %1024 = vmatprep.subr.bf16.mxu0 0
    %1025 = vmatpush1.bf16.xpose.msra.mxu0 0
    %1026 = vmatprep.subr.bf16.mxu0 0
    %1027 = vmatpush1.bf16.xpose.msra.mxu0 0
    %1028 = vmatprep.subr.bf16.mxu0 0
    %1029 = vmatpush1.bf16.xpose.msra.mxu0 0
    %1030 = vmatprep.subr.bf16.mxu0 0
    %1031 = vmatpush1.bf16.xpose.msra.mxu0 0
    %1032 = vmatprep.subr.bf16.mxu0 0
    %1033 = vmatpush1.bf16.xpose.msra.mxu0 0
    %1034 = vmatprep.subr.bf16.mxu0 0
    %1035 = vmatpush1.bf16.xpose.msra.mxu0 0
    %1036 = vmatprep.subr.bf16.mxu0 0
    %1037 = vmatpush1.bf16.xpose.msra.mxu0 0
    %1038 = vmatprep.subr.bf16.mxu0 0
    %1039 = vmatpush1.bf16.xpose.msra.mxu0 0
    %1040 = vmatprep.subr.bf16.mxu0 0
    %1041 = vmatpush1.bf16.xpose.msra.mxu0 0
    %1042 = vmatprep.subr.bf16.mxu0 0
    %1043 = vmatpush1.bf16.xpose.msra.mxu0 0
    %1044 = vmatprep.subr.bf16.mxu0 0
    %1045 = vmatpush1.bf16.xpose.msra.mxu0 0
    %1046 = vmatprep.subr.bf16.mxu0 0
    %1047 = vmatpush1.bf16.xpose.msra.mxu0 0
    %1048 = vmatprep.mubr.bf16.mxu0 0
    %1049 = vmatmul.mubr.bf16.gmra.mrb[0].mxu0 %v1011
    %v1050 = vpop.f32.mrb[0].mxu0
    %v1051 = vadd.f32 0.0, %v1050
    %v1052 = vpop.f32.mrb[0].mxu0
    %v1053 = vpop.f32.mrb[0].mxu0
    %v1054 = vpop.f32.mrb[0].mxu0
    %1055 = vdwg.mxu0
    %v1057 = vsel %vm779, %v751, 0
    %v1060 = vsel %vm779, %v763, 0
    %1062 = vmatprep.subr.bf16.mxu0 0
    %1063 = vmatpush1.bf16.xpose.msra.mxu0 %v1060
    %1064 = vmatprep.subr.bf16.mxu0 0
    %1065 = vmatpush1.bf16.xpose.msra.mxu0 0
    %1066 = vmatprep.subr.bf16.mxu0 0
    %1067 = vmatpush1.bf16.xpose.msra.mxu0 0
    %1068 = vmatprep.subr.bf16.mxu0 0
    %1069 = vmatpush1.bf16.xpose.msra.mxu0 0
    %1070 = vmatprep.subr.bf16.mxu0 0
    %1071 = vmatpush1.bf16.xpose.msra.mxu0 0
    %1072 = vmatprep.subr.bf16.mxu0 0
    %1073 = vmatpush1.bf16.xpose.msra.mxu0 0
    %1074 = vmatprep.subr.bf16.mxu0 0
    %1075 = vmatpush1.bf16.xpose.msra.mxu0 0
    %1076 = vmatprep.subr.bf16.mxu0 0
    %1077 = vmatpush1.bf16.xpose.msra.mxu0 0
    %1078 = vmatprep.subr.bf16.mxu0 0
    %1079 = vmatpush1.bf16.xpose.msra.mxu0 0
    %1080 = vmatprep.subr.bf16.mxu0 0
    %1081 = vmatpush1.bf16.xpose.msra.mxu0 0
    %1082 = vmatprep.subr.bf16.mxu0 0
    %1083 = vmatpush1.bf16.xpose.msra.mxu0 0
    %1084 = vmatprep.subr.bf16.mxu0 0
    %1085 = vmatpush1.bf16.xpose.msra.mxu0 0
    %1086 = vmatprep.subr.bf16.mxu0 0
    %1087 = vmatpush1.bf16.xpose.msra.mxu0 0
    %1088 = vmatprep.subr.bf16.mxu0 0
    %1089 = vmatpush1.bf16.xpose.msra.mxu0 0
    %1090 = vmatprep.subr.bf16.mxu0 0
    %1091 = vmatpush1.bf16.xpose.msra.mxu0 0
    %1092 = vmatprep.subr.bf16.mxu0 0
    %1093 = vmatpush1.bf16.xpose.msra.mxu0 0
    %1094 = vmatprep.mubr.bf16.mxu0 0
    %1095 = vmatmul.mubr.bf16.gmra.mrb[0].mxu0 %v1057
    %v1096 = vpop.f32.mrb[0].mxu0
    %v1097 = vadd.f32 0.0, %v1096
    %v1098 = vpop.f32.mrb[0].mxu0
    %v1099 = vpop.f32.mrb[0].mxu0
    %v1100 = vpop.f32.mrb[0].mxu0
    %1101 = vdwg.mxu0
    %v1103 = vsel %vm779, %v754, 0
    %v1106 = vsel %vm779, %v766, 0
    %1108 = vmatprep.subr.bf16.mxu0 0
    %1109 = vmatpush1.bf16.xpose.msra.mxu0 %v1106
    %1110 = vmatprep.subr.bf16.mxu0 0
    %1111 = vmatpush1.bf16.xpose.msra.mxu0 0
    %1112 = vmatprep.subr.bf16.mxu0 0
    %1113 = vmatpush1.bf16.xpose.msra.mxu0 0
    %1114 = vmatprep.subr.bf16.mxu0 0
    %1115 = vmatpush1.bf16.xpose.msra.mxu0 0
    %1116 = vmatprep.subr.bf16.mxu0 0
    %1117 = vmatpush1.bf16.xpose.msra.mxu0 0
    %1118 = vmatprep.subr.bf16.mxu0 0
    %1119 = vmatpush1.bf16.xpose.msra.mxu0 0
    %1120 = vmatprep.subr.bf16.mxu0 0
    %1121 = vmatpush1.bf16.xpose.msra.mxu0 0
    %1122 = vmatprep.subr.bf16.mxu0 0
    %1123 = vmatpush1.bf16.xpose.msra.mxu0 0
    %1124 = vmatprep.subr.bf16.mxu0 0
    %1125 = vmatpush1.bf16.xpose.msra.mxu0 0
    %1126 = vmatprep.subr.bf16.mxu0 0
    %1127 = vmatpush1.bf16.xpose.msra.mxu0 0
    %1128 = vmatprep.subr.bf16.mxu0 0
    %1129 = vmatpush1.bf16.xpose.msra.mxu0 0
    %1130 = vmatprep.subr.bf16.mxu0 0
    %1131 = vmatpush1.bf16.xpose.msra.mxu0 0
    %1132 = vmatprep.subr.bf16.mxu0 0
    %1133 = vmatpush1.bf16.xpose.msra.mxu0 0
    %1134 = vmatprep.subr.bf16.mxu0 0
    %1135 = vmatpush1.bf16.xpose.msra.mxu0 0
    %1136 = vmatprep.subr.bf16.mxu0 0
    %1137 = vmatpush1.bf16.xpose.msra.mxu0 0
    %1138 = vmatprep.subr.bf16.mxu0 0
    %1139 = vmatpush1.bf16.xpose.msra.mxu0 0
    %1140 = vmatprep.mubr.bf16.mxu0 0
    %1141 = vmatmul.mubr.bf16.gmra.mrb[0].mxu0 %v1103
    %v1142 = vpop.f32.mrb[0].mxu0
    %v1143 = vadd.f32 0.0, %v1142
    %v1144 = vpop.f32.mrb[0].mxu0
    %v1145 = vpop.f32.mrb[0].mxu0
    %v1146 = vpop.f32.mrb[0].mxu0
    %1147 = vdwg.mxu0
    %v1148 = vmul.f32 %v821, 0.25
    %v1149 = vmul.f32 %v867, 0.25
    %v1150 = vmul.f32 %v913, 0.25
    %v1151 = vmul.f32 %v959, 0.25
    %v1152 = vmul.f32 %v1005, 0.25
    %v1153 = vmul.f32 %v1051, 0.25
    %v1154 = vmul.f32 %v1097, 0.25
    %v1155 = vmul.f32 %v1143, 0.25
    %vm1156 = vcmask 64512
    %v1157 = vsel %vm1156, %v1148, -inf
    %1158 = vmax.xlane.f32.xlu0 %v1157
    %v1159 = vpop.xlane.xlu0 %1158
    %v1160 = vsel %vm1156, %v1149, -inf
    %1161 = vmax.xlane.f32.xlu0 %v1160
    %v1162 = vpop.xlane.xlu0 %1161
    %v1163 = vsel %vm1156, %v1150, -inf
    %1164 = vmax.xlane.f32.xlu0 %v1163
    %v1165 = vpop.xlane.xlu0 %1164
    %v1166 = vsel %vm1156, %v1151, -inf
    %1167 = vmax.xlane.f32.xlu0 %v1166
    %v1168 = vpop.xlane.xlu0 %1167
    %v1169 = vsel %vm1156, %v1152, -inf
    %1170 = vmax.xlane.f32.xlu0 %v1169
    %v1171 = vpop.xlane.xlu0 %1170
    %v1172 = vsel %vm1156, %v1153, -inf
    %1173 = vmax.xlane.f32.xlu0 %v1172
    %v1174 = vpop.xlane.xlu0 %1173
    %v1175 = vsel %vm1156, %v1154, -inf
    %1176 = vmax.xlane.f32.xlu0 %v1175
    %v1177 = vpop.xlane.xlu0 %1176
    %v1178 = vsel %vm1156, %v1155, -inf
    %1179 = vmax.xlane.f32.xlu0 %v1178
    %v1180 = vpop.xlane.xlu0 %1179
    %v1181 = vsub.f32 %v1148, %v1159
    %v1182 = vsub.f32 %v1149, %v1162
    %v1183 = vsub.f32 %v1150, %v1165
    %v1184 = vsub.f32 %v1151, %v1168
    %v1185 = vsub.f32 %v1152, %v1171
    %v1186 = vsub.f32 %v1153, %v1174
    %v1187 = vsub.f32 %v1154, %v1177
    %v1188 = vsub.f32 %v1155, %v1180
    %v1189 = vmul.f32 %v1181, 1.442695
    %v1190 = vpow.pop %v1189
    %v1191 = vmul.f32 %v1182, 1.442695
    %v1192 = vpow.pop %v1191
    %v1193 = vmul.f32 %v1183, 1.442695
    %v1194 = vpow.pop %v1193
    %v1195 = vmul.f32 %v1184, 1.442695
    %v1196 = vpow.pop %v1195
    %v1197 = vmul.f32 %v1185, 1.442695
    %v1198 = vpow.pop %v1197
    %v1199 = vmul.f32 %v1186, 1.442695
    %v1200 = vpow.pop %v1199
    %v1201 = vmul.f32 %v1187, 1.442695
    %v1202 = vpow.pop %v1201
    %v1203 = vmul.f32 %v1188, 1.442695
    %v1204 = vpow.pop %v1203
    %v1205 = vsel %vm1156, %v1190, 0.0
    %1206 = vadd.xlane.f32.xlu0 %v1205
    %v1207 = vpop.xlane.xlu0 %1206
    %v1208 = vsel %vm1156, %v1192, 0.0
    %1209 = vadd.xlane.f32.xlu0 %v1208
    %v1210 = vpop.xlane.xlu0 %1209
    %v1211 = vsel %vm1156, %v1194, 0.0
    %1212 = vadd.xlane.f32.xlu0 %v1211
    %v1213 = vpop.xlane.xlu0 %1212
    %v1214 = vsel %vm1156, %v1196, 0.0
    %1215 = vadd.xlane.f32.xlu0 %v1214
    %v1216 = vpop.xlane.xlu0 %1215
    %v1217 = vsel %vm1156, %v1198, 0.0
    %1218 = vadd.xlane.f32.xlu0 %v1217
    %v1219 = vpop.xlane.xlu0 %1218
    %v1220 = vsel %vm1156, %v1200, 0.0
    %1221 = vadd.xlane.f32.xlu0 %v1220
    %v1222 = vpop.xlane.xlu0 %1221
    %v1223 = vsel %vm1156, %v1202, 0.0
    %1224 = vadd.xlane.f32.xlu0 %v1223
    %v1225 = vpop.xlane.xlu0 %1224
    %v1226 = vsel %vm1156, %v1204, 0.0
    %1227 = vadd.xlane.f32.xlu0 %v1226
    %v1228 = vpop.xlane.xlu0 %1227
    %v1229 = vrcp.pop %v1207
    %v1230 = vrcp.pop %v1210
    %v1231 = vrcp.pop %v1213
    %v1232 = vrcp.pop %v1216
    %v1233 = vrcp.pop %v1219
    %v1234 = vrcp.pop %v1222
    %v1235 = vrcp.pop %v1225
    %v1236 = vrcp.pop %v1228
    %v1237 = vmul.f32 %v1190, %v1229
    %v1238 = vmul.f32 %v1192, %v1230
    %v1239 = vmul.f32 %v1194, %v1231
    %v1240 = vmul.f32 %v1196, %v1232
    %v1241 = vmul.f32 %v1198, %v1233
    %v1242 = vmul.f32 %v1200, %v1234
    %v1243 = vmul.f32 %v1202, %v1235
    %v1244 = vmul.f32 %v1204, %v1236
    %v1245 = vpack.c.bf16 %v1237, %v1237
    %v1246 = vpack.c.bf16 %v1238, %v1238
    %v1247 = vpack.c.bf16 %v1239, %v1239
    %v1248 = vpack.c.bf16 %v1240, %v1240
    %v1249 = vpack.c.bf16 %v1241, %v1241
    %v1250 = vpack.c.bf16 %v1242, %v1242
    %v1251 = vpack.c.bf16 %v1243, %v1243
    %v1252 = vpack.c.bf16 %v1244, %v1244
    %v1254 = vsel %vm1156, %v1245, 0
    %vm1256 = vcmask 1043456
    %v1258 = vsel %vm1256, %v733, 0
    %1260 = vmatprep.subr.bf16.mxu0 0
    %1261 = vmatpush1.bf16.msra.mxu0 %v1258
    %1262 = vmatprep.subr.bf16.mxu0 0
    %1263 = vmatpush1.bf16.msra.mxu0 0
    %1264 = vmatprep.subr.bf16.mxu0 0
    %1265 = vmatpush1.bf16.msra.mxu0 0
    %1266 = vmatprep.subr.bf16.mxu0 0
    %1267 = vmatpush1.bf16.msra.mxu0 0
    %1268 = vmatprep.subr.bf16.mxu0 0
    %1269 = vmatpush1.bf16.msra.mxu0 0
    %1270 = vmatprep.subr.bf16.mxu0 0
    %1271 = vmatpush1.bf16.msra.mxu0 0
    %1272 = vmatprep.subr.bf16.mxu0 0
    %1273 = vmatpush1.bf16.msra.mxu0 0
    %1274 = vmatprep.subr.bf16.mxu0 0
    %1275 = vmatpush1.bf16.msra.mxu0 0
    %1276 = vmatprep.subr.bf16.mxu0 0
    %1277 = vmatpush1.bf16.msra.mxu0 0
    %1278 = vmatprep.subr.bf16.mxu0 0
    %1279 = vmatpush1.bf16.msra.mxu0 0
    %1280 = vmatprep.subr.bf16.mxu0 0
    %1281 = vmatpush1.bf16.msra.mxu0 0
    %1282 = vmatprep.subr.bf16.mxu0 0
    %1283 = vmatpush1.bf16.msra.mxu0 0
    %1284 = vmatprep.subr.bf16.mxu0 0
    %1285 = vmatpush1.bf16.msra.mxu0 0
    %1286 = vmatprep.subr.bf16.mxu0 0
    %1287 = vmatpush1.bf16.msra.mxu0 0
    %1288 = vmatprep.subr.bf16.mxu0 0
    %1289 = vmatpush1.bf16.msra.mxu0 0
    %1290 = vmatprep.subr.bf16.mxu0 0
    %1291 = vmatpush1.bf16.msra.mxu0 0
    %1292 = vmatprep.mubr.bf16.mxu0 0
    %1293 = vmatmul.mubr.bf16.gmra.mrb[0].mxu0 %v1254
    %v1294 = vpop.f32.mrb[0].mxu0
    %v1295 = vadd.f32 0.0, %v1294
    %v1296 = vpop.f32.mrb[0].mxu0
    %v1297 = vpop.f32.mrb[0].mxu0
    %v1298 = vpop.f32.mrb[0].mxu0
    %1299 = vdwg.mxu0
    %v1301 = vsel %vm1156, %v1246, 0
    %v1304 = vsel %vm1256, %v736, 0
    %1306 = vmatprep.subr.bf16.mxu0 0
    %1307 = vmatpush1.bf16.msra.mxu0 %v1304
    %1308 = vmatprep.subr.bf16.mxu0 0
    %1309 = vmatpush1.bf16.msra.mxu0 0
    %1310 = vmatprep.subr.bf16.mxu0 0
    %1311 = vmatpush1.bf16.msra.mxu0 0
    %1312 = vmatprep.subr.bf16.mxu0 0
    %1313 = vmatpush1.bf16.msra.mxu0 0
    %1314 = vmatprep.subr.bf16.mxu0 0
    %1315 = vmatpush1.bf16.msra.mxu0 0
    %1316 = vmatprep.subr.bf16.mxu0 0
    %1317 = vmatpush1.bf16.msra.mxu0 0
    %1318 = vmatprep.subr.bf16.mxu0 0
    %1319 = vmatpush1.bf16.msra.mxu0 0
    %1320 = vmatprep.subr.bf16.mxu0 0
    %1321 = vmatpush1.bf16.msra.mxu0 0
    %1322 = vmatprep.subr.bf16.mxu0 0
    %1323 = vmatpush1.bf16.msra.mxu0 0
    %1324 = vmatprep.subr.bf16.mxu0 0
    %1325 = vmatpush1.bf16.msra.mxu0 0
    %1326 = vmatprep.subr.bf16.mxu0 0
    %1327 = vmatpush1.bf16.msra.mxu0 0
    %1328 = vmatprep.subr.bf16.mxu0 0
    %1329 = vmatpush1.bf16.msra.mxu0 0
    %1330 = vmatprep.subr.bf16.mxu0 0
    %1331 = vmatpush1.bf16.msra.mxu0 0
    %1332 = vmatprep.subr.bf16.mxu0 0
    %1333 = vmatpush1.bf16.msra.mxu0 0
    %1334 = vmatprep.subr.bf16.mxu0 0
    %1335 = vmatpush1.bf16.msra.mxu0 0
    %1336 = vmatprep.subr.bf16.mxu0 0
    %1337 = vmatpush1.bf16.msra.mxu0 0
    %1338 = vmatprep.mubr.bf16.mxu0 0
    %1339 = vmatmul.mubr.bf16.gmra.mrb[0].mxu0 %v1301
    %v1340 = vpop.f32.mrb[0].mxu0
    %v1341 = vadd.f32 0.0, %v1340
    %v1342 = vpop.f32.mrb[0].mxu0
    %v1343 = vpop.f32.mrb[0].mxu0
    %v1344 = vpop.f32.mrb[0].mxu0
    %1345 = vdwg.mxu0
    %v1347 = vsel %vm1156, %v1247, 0
    %v1350 = vsel %vm1256, %v739, 0
    %1352 = vmatprep.subr.bf16.mxu0 0
    %1353 = vmatpush1.bf16.msra.mxu0 %v1350
    %1354 = vmatprep.subr.bf16.mxu0 0
    %1355 = vmatpush1.bf16.msra.mxu0 0
    %1356 = vmatprep.subr.bf16.mxu0 0
    %1357 = vmatpush1.bf16.msra.mxu0 0
    %1358 = vmatprep.subr.bf16.mxu0 0
    %1359 = vmatpush1.bf16.msra.mxu0 0
    %1360 = vmatprep.subr.bf16.mxu0 0
    %1361 = vmatpush1.bf16.msra.mxu0 0
    %1362 = vmatprep.subr.bf16.mxu0 0
    %1363 = vmatpush1.bf16.msra.mxu0 0
    %1364 = vmatprep.subr.bf16.mxu0 0
    %1365 = vmatpush1.bf16.msra.mxu0 0
    %1366 = vmatprep.subr.bf16.mxu0 0
    %1367 = vmatpush1.bf16.msra.mxu0 0
    %1368 = vmatprep.subr.bf16.mxu0 0
    %1369 = vmatpush1.bf16.msra.mxu0 0
    %1370 = vmatprep.subr.bf16.mxu0 0
    %1371 = vmatpush1.bf16.msra.mxu0 0
    %1372 = vmatprep.subr.bf16.mxu0 0
    %1373 = vmatpush1.bf16.msra.mxu0 0
    %1374 = vmatprep.subr.bf16.mxu0 0
    %1375 = vmatpush1.bf16.msra.mxu0 0
    %1376 = vmatprep.subr.bf16.mxu0 0
    %1377 = vmatpush1.bf16.msra.mxu0 0
    %1378 = vmatprep.subr.bf16.mxu0 0
    %1379 = vmatpush1.bf16.msra.mxu0 0
    %1380 = vmatprep.subr.bf16.mxu0 0
    %1381 = vmatpush1.bf16.msra.mxu0 0
    %1382 = vmatprep.subr.bf16.mxu0 0
    %1383 = vmatpush1.bf16.msra.mxu0 0
    %1384 = vmatprep.mubr.bf16.mxu0 0
    %1385 = vmatmul.mubr.bf16.gmra.mrb[0].mxu0 %v1347
    %v1386 = vpop.f32.mrb[0].mxu0
    %v1387 = vadd.f32 0.0, %v1386
    %v1388 = vpop.f32.mrb[0].mxu0
    %v1389 = vpop.f32.mrb[0].mxu0
    %v1390 = vpop.f32.mrb[0].mxu0
    %1391 = vdwg.mxu0
    %v1393 = vsel %vm1156, %v1248, 0
    %v1396 = vsel %vm1256, %v742, 0
    %1398 = vmatprep.subr.bf16.mxu0 0
    %1399 = vmatpush1.bf16.msra.mxu0 %v1396
    %1400 = vmatprep.subr.bf16.mxu0 0
    %1401 = vmatpush1.bf16.msra.mxu0 0
    %1402 = vmatprep.subr.bf16.mxu0 0
    %1403 = vmatpush1.bf16.msra.mxu0 0
    %1404 = vmatprep.subr.bf16.mxu0 0
    %1405 = vmatpush1.bf16.msra.mxu0 0
    %1406 = vmatprep.subr.bf16.mxu0 0
    %1407 = vmatpush1.bf16.msra.mxu0 0
    %1408 = vmatprep.subr.bf16.mxu0 0
    %1409 = vmatpush1.bf16.msra.mxu0 0
    %1410 = vmatprep.subr.bf16.mxu0 0
    %1411 = vmatpush1.bf16.msra.mxu0 0
    %1412 = vmatprep.subr.bf16.mxu0 0
    %1413 = vmatpush1.bf16.msra.mxu0 0
    %1414 = vmatprep.subr.bf16.mxu0 0
    %1415 = vmatpush1.bf16.msra.mxu0 0
    %1416 = vmatprep.subr.bf16.mxu0 0
    %1417 = vmatpush1.bf16.msra.mxu0 0
    %1418 = vmatprep.subr.bf16.mxu0 0
    %1419 = vmatpush1.bf16.msra.mxu0 0
    %1420 = vmatprep.subr.bf16.mxu0 0
    %1421 = vmatpush1.bf16.msra.mxu0 0
    %1422 = vmatprep.subr.bf16.mxu0 0
    %1423 = vmatpush1.bf16.msra.mxu0 0
    %1424 = vmatprep.subr.bf16.mxu0 0
    %1425 = vmatpush1.bf16.msra.mxu0 0
    %1426 = vmatprep.subr.bf16.mxu0 0
    %1427 = vmatpush1.bf16.msra.mxu0 0
    %1428 = vmatprep.subr.bf16.mxu0 0
    %1429 = vmatpush1.bf16.msra.mxu0 0
    %1430 = vmatprep.mubr.bf16.mxu0 0
    %1431 = vmatmul.mubr.bf16.gmra.mrb[0].mxu0 %v1393
    %v1432 = vpop.f32.mrb[0].mxu0
    %v1433 = vadd.f32 0.0, %v1432
    %v1434 = vpop.f32.mrb[0].mxu0
    %v1435 = vpop.f32.mrb[0].mxu0
    %v1436 = vpop.f32.mrb[0].mxu0
    %1437 = vdwg.mxu0
    %v1439 = vsel %vm1156, %v1249, 0
    %v1442 = vsel %vm1256, %v769, 0
    %1444 = vmatprep.subr.bf16.mxu0 0
    %1445 = vmatpush1.bf16.msra.mxu0 %v1442
    %1446 = vmatprep.subr.bf16.mxu0 0
    %1447 = vmatpush1.bf16.msra.mxu0 0
    %1448 = vmatprep.subr.bf16.mxu0 0
    %1449 = vmatpush1.bf16.msra.mxu0 0
    %1450 = vmatprep.subr.bf16.mxu0 0
    %1451 = vmatpush1.bf16.msra.mxu0 0
    %1452 = vmatprep.subr.bf16.mxu0 0
    %1453 = vmatpush1.bf16.msra.mxu0 0
    %1454 = vmatprep.subr.bf16.mxu0 0
    %1455 = vmatpush1.bf16.msra.mxu0 0
    %1456 = vmatprep.subr.bf16.mxu0 0
    %1457 = vmatpush1.bf16.msra.mxu0 0
    %1458 = vmatprep.subr.bf16.mxu0 0
    %1459 = vmatpush1.bf16.msra.mxu0 0
    %1460 = vmatprep.subr.bf16.mxu0 0
    %1461 = vmatpush1.bf16.msra.mxu0 0
    %1462 = vmatprep.subr.bf16.mxu0 0
    %1463 = vmatpush1.bf16.msra.mxu0 0
    %1464 = vmatprep.subr.bf16.mxu0 0
    %1465 = vmatpush1.bf16.msra.mxu0 0
    %1466 = vmatprep.subr.bf16.mxu0 0
    %1467 = vmatpush1.bf16.msra.mxu0 0
    %1468 = vmatprep.subr.bf16.mxu0 0
    %1469 = vmatpush1.bf16.msra.mxu0 0
    %1470 = vmatprep.subr.bf16.mxu0 0
    %1471 = vmatpush1.bf16.msra.mxu0 0
    %1472 = vmatprep.subr.bf16.mxu0 0
    %1473 = vmatpush1.bf16.msra.mxu0 0
    %1474 = vmatprep.subr.bf16.mxu0 0
    %1475 = vmatpush1.bf16.msra.mxu0 0
    %1476 = vmatprep.mubr.bf16.mxu0 0
    %1477 = vmatmul.mubr.bf16.gmra.mrb[0].mxu0 %v1439
    %v1478 = vpop.f32.mrb[0].mxu0
    %v1479 = vadd.f32 0.0, %v1478
    %v1480 = vpop.f32.mrb[0].mxu0
    %v1481 = vpop.f32.mrb[0].mxu0
    %v1482 = vpop.f32.mrb[0].mxu0
    %1483 = vdwg.mxu0
    %v1485 = vsel %vm1156, %v1250, 0
    %v1488 = vsel %vm1256, %v772, 0
    %1490 = vmatprep.subr.bf16.mxu0 0
    %1491 = vmatpush1.bf16.msra.mxu0 %v1488
    %1492 = vmatprep.subr.bf16.mxu0 0
    %1493 = vmatpush1.bf16.msra.mxu0 0
    %1494 = vmatprep.subr.bf16.mxu0 0
    %1495 = vmatpush1.bf16.msra.mxu0 0
    %1496 = vmatprep.subr.bf16.mxu0 0
    %1497 = vmatpush1.bf16.msra.mxu0 0
    %1498 = vmatprep.subr.bf16.mxu0 0
    %1499 = vmatpush1.bf16.msra.mxu0 0
    %1500 = vmatprep.subr.bf16.mxu0 0
    %1501 = vmatpush1.bf16.msra.mxu0 0
    %1502 = vmatprep.subr.bf16.mxu0 0
    %1503 = vmatpush1.bf16.msra.mxu0 0
    %1504 = vmatprep.subr.bf16.mxu0 0
    %1505 = vmatpush1.bf16.msra.mxu0 0
    %1506 = vmatprep.subr.bf16.mxu0 0
    %1507 = vmatpush1.bf16.msra.mxu0 0
    %1508 = vmatprep.subr.bf16.mxu0 0
    %1509 = vmatpush1.bf16.msra.mxu0 0
    %1510 = vmatprep.subr.bf16.mxu0 0
    %1511 = vmatpush1.bf16.msra.mxu0 0
    %1512 = vmatprep.subr.bf16.mxu0 0
    %1513 = vmatpush1.bf16.msra.mxu0 0
    %1514 = vmatprep.subr.bf16.mxu0 0
    %1515 = vmatpush1.bf16.msra.mxu0 0
    %1516 = vmatprep.subr.bf16.mxu0 0
    %1517 = vmatpush1.bf16.msra.mxu0 0
    %1518 = vmatprep.subr.bf16.mxu0 0
    %1519 = vmatpush1.bf16.msra.mxu0 0
    %1520 = vmatprep.subr.bf16.mxu0 0
    %1521 = vmatpush1.bf16.msra.mxu0 0
    %1522 = vmatprep.mubr.bf16.mxu0 0
    %1523 = vmatmul.mubr.bf16.gmra.mrb[0].mxu0 %v1485
    %v1524 = vpop.f32.mrb[0].mxu0
    %v1525 = vadd.f32 0.0, %v1524
    %v1526 = vpop.f32.mrb[0].mxu0
    %v1527 = vpop.f32.mrb[0].mxu0
    %v1528 = vpop.f32.mrb[0].mxu0
    %1529 = vdwg.mxu0
    %v1531 = vsel %vm1156, %v1251, 0
    %v1534 = vsel %vm1256, %v775, 0
    %1536 = vmatprep.subr.bf16.mxu0 0
    %1537 = vmatpush1.bf16.msra.mxu0 %v1534
    %1538 = vmatprep.subr.bf16.mxu0 0
    %1539 = vmatpush1.bf16.msra.mxu0 0
    %1540 = vmatprep.subr.bf16.mxu0 0
    %1541 = vmatpush1.bf16.msra.mxu0 0
    %1542 = vmatprep.subr.bf16.mxu0 0
    %1543 = vmatpush1.bf16.msra.mxu0 0
    %1544 = vmatprep.subr.bf16.mxu0 0
    %1545 = vmatpush1.bf16.msra.mxu0 0
    %1546 = vmatprep.subr.bf16.mxu0 0
    %1547 = vmatpush1.bf16.msra.mxu0 0
    %1548 = vmatprep.subr.bf16.mxu0 0
    %1549 = vmatpush1.bf16.msra.mxu0 0
    %1550 = vmatprep.subr.bf16.mxu0 0
    %1551 = vmatpush1.bf16.msra.mxu0 0
    %1552 = vmatprep.subr.bf16.mxu0 0
    %1553 = vmatpush1.bf16.msra.mxu0 0
    %1554 = vmatprep.subr.bf16.mxu0 0
    %1555 = vmatpush1.bf16.msra.mxu0 0
    %1556 = vmatprep.subr.bf16.mxu0 0
    %1557 = vmatpush1.bf16.msra.mxu0 0
    %1558 = vmatprep.subr.bf16.mxu0 0
    %1559 = vmatpush1.bf16.msra.mxu0 0
    %1560 = vmatprep.subr.bf16.mxu0 0
    %1561 = vmatpush1.bf16.msra.mxu0 0
    %1562 = vmatprep.subr.bf16.mxu0 0
    %1563 = vmatpush1.bf16.msra.mxu0 0
    %1564 = vmatprep.subr.bf16.mxu0 0
    %1565 = vmatpush1.bf16.msra.mxu0 0
    %1566 = vmatprep.subr.bf16.mxu0 0
    %1567 = vmatpush1.bf16.msra.mxu0 0
    %1568 = vmatprep.mubr.bf16.mxu0 0
    %1569 = vmatmul.mubr.bf16.gmra.mrb[0].mxu0 %v1531
    %v1570 = vpop.f32.mrb[0].mxu0
    %v1571 = vadd.f32 0.0, %v1570
    %v1572 = vpop.f32.mrb[0].mxu0
    %v1573 = vpop.f32.mrb[0].mxu0
    %v1574 = vpop.f32.mrb[0].mxu0
    %1575 = vdwg.mxu0
    %v1577 = vsel %vm1156, %v1252, 0
    %v1580 = vsel %vm1256, %v778, 0
    %1582 = vmatprep.subr.bf16.mxu0 0
    %1583 = vmatpush1.bf16.msra.mxu0 %v1580
    %1584 = vmatprep.subr.bf16.mxu0 0
    %1585 = vmatpush1.bf16.msra.mxu0 0
    %1586 = vmatprep.subr.bf16.mxu0 0
    %1587 = vmatpush1.bf16.msra.mxu0 0
    %1588 = vmatprep.subr.bf16.mxu0 0
    %1589 = vmatpush1.bf16.msra.mxu0 0
    %1590 = vmatprep.subr.bf16.mxu0 0
    %1591 = vmatpush1.bf16.msra.mxu0 0
    %1592 = vmatprep.subr.bf16.mxu0 0
    %1593 = vmatpush1.bf16.msra.mxu0 0
    %1594 = vmatprep.subr.bf16.mxu0 0
    %1595 = vmatpush1.bf16.msra.mxu0 0
    %1596 = vmatprep.subr.bf16.mxu0 0
    %1597 = vmatpush1.bf16.msra.mxu0 0
    %1598 = vmatprep.subr.bf16.mxu0 0
    %1599 = vmatpush1.bf16.msra.mxu0 0
    %1600 = vmatprep.subr.bf16.mxu0 0
    %1601 = vmatpush1.bf16.msra.mxu0 0
    %1602 = vmatprep.subr.bf16.mxu0 0
    %1603 = vmatpush1.bf16.msra.mxu0 0
    %1604 = vmatprep.subr.bf16.mxu0 0
    %1605 = vmatpush1.bf16.msra.mxu0 0
    %1606 = vmatprep.subr.bf16.mxu0 0
    %1607 = vmatpush1.bf16.msra.mxu0 0
    %1608 = vmatprep.subr.bf16.mxu0 0
    %1609 = vmatpush1.bf16.msra.mxu0 0
    %1610 = vmatprep.subr.bf16.mxu0 0
    %1611 = vmatpush1.bf16.msra.mxu0 0
    %1612 = vmatprep.subr.bf16.mxu0 0
    %1613 = vmatpush1.bf16.msra.mxu0 0
    %1614 = vmatprep.mubr.bf16.mxu0 0
    %1615 = vmatmul.mubr.bf16.gmra.mrb[0].mxu0 %v1577
    %v1616 = vpop.f32.mrb[0].mxu0
    %v1617 = vadd.f32 0.0, %v1616
    %v1618 = vpop.f32.mrb[0].mxu0
    %v1619 = vpop.f32.mrb[0].mxu0
    %v1620 = vpop.f32.mrb[0].mxu0
    %1621 = vdwg.mxu0
    %v1622 = vpack.c.bf16 %v1295, %v1295
    %v1624 = vunpack.c.l.s4 1983009808
    %v1625 = vunpack.c.0.s8 %v1624
    %v1626 = vlaneseq
    %v1627 = vshrl.u32 %v1626, 7
    %v1628 = vsub.s32 %v1625, %v1627
    %v1629 = vrot.slane %v1622, %v1628
    %v1630 = vpack.c.bf16 %v1387, %v1387
    %v1632 = vunpack.c.l.s4 1983009808
    %v1633 = vunpack.c.0.s8 %v1632
    %v1634 = vlaneseq
    %v1635 = vshrl.u32 %v1634, 7
    %v1636 = vsub.s32 %v1633, %v1635
    %v1637 = vrot.slane %v1630, %v1636
    %v1638 = vcombine.low %v1629, %v1637
    %v1639 = vcombine.high %v1629, %v1637
    %v1641 = vunpack.c.l.s4 1934713408
    %v1642 = vunpack.c.0.s8 %v1641
    %v1643 = vlaneseq
    %v1644 = vshrl.u32 %v1643, 7
    %v1645 = vsub.s32 %v1642, %v1644
    %v1646 = vrot.slane %v1638, %v1645
    %v1648 = vunpack.c.l.s4 1934713408
    %v1649 = vunpack.c.0.s8 %v1648
    %v1650 = vlaneseq
    %v1651 = vshrl.u32 %v1650, 7
    %v1652 = vsub.s32 %v1649, %v1651
    %v1653 = vrot.slane %v1639, %v1652
    %v1654 = vcombine.high %v1646, 0
    %v1655 = vcombine.high %v1653, 0
    %v1656 = vpack.c.bf16 %v1341, %v1341
    %v1658 = vunpack.c.l.s4 1983009808
    %v1659 = vunpack.c.0.s8 %v1658
    %v1660 = vlaneseq
    %v1661 = vshrl.u32 %v1660, 7
    %v1662 = vsub.s32 %v1659, %v1661
    %v1663 = vrot.slane %v1656, %v1662
    %v1664 = vpack.c.bf16 %v1433, %v1433
    %v1666 = vunpack.c.l.s4 1983009808
    %v1667 = vunpack.c.0.s8 %v1666
    %v1668 = vlaneseq
    %v1669 = vshrl.u32 %v1668, 7
    %v1670 = vsub.s32 %v1667, %v1669
    %v1671 = vrot.slane %v1664, %v1670
    %v1672 = vcombine.low %v1663, %v1671
    %v1673 = vcombine.high %v1663, %v1671
    %v1675 = vunpack.c.l.s4 1934713408
    %v1676 = vunpack.c.0.s8 %v1675
    %v1677 = vlaneseq
    %v1678 = vshrl.u32 %v1677, 7
    %v1679 = vsub.s32 %v1676, %v1678
    %v1680 = vrot.slane %v1672, %v1679
    %v1682 = vunpack.c.l.s4 1934713408
    %v1683 = vunpack.c.0.s8 %v1682
    %v1684 = vlaneseq
    %v1685 = vshrl.u32 %v1684, 7
    %v1686 = vsub.s32 %v1683, %v1685
    %v1687 = vrot.slane %v1673, %v1686
    %v1688 = vcombine.high %v1680, 0
    %v1689 = vcombine.high %v1687, 0
    %v1690 = vpack.c.bf16 %v1479, %v1479
    %v1692 = vunpack.c.l.s4 1983009808
    %v1693 = vunpack.c.0.s8 %v1692
    %v1694 = vlaneseq
    %v1695 = vshrl.u32 %v1694, 7
    %v1696 = vsub.s32 %v1693, %v1695
    %v1697 = vrot.slane %v1690, %v1696
    %v1698 = vpack.c.bf16 %v1571, %v1571
    %v1700 = vunpack.c.l.s4 1983009808
    %v1701 = vunpack.c.0.s8 %v1700
    %v1702 = vlaneseq
    %v1703 = vshrl.u32 %v1702, 7
    %v1704 = vsub.s32 %v1701, %v1703
    %v1705 = vrot.slane %v1698, %v1704
    %v1706 = vcombine.low %v1697, %v1705
    %v1707 = vcombine.high %v1697, %v1705
    %v1709 = vunpack.c.l.s4 1934713408
    %v1710 = vunpack.c.0.s8 %v1709
    %v1711 = vlaneseq
    %v1712 = vshrl.u32 %v1711, 7
    %v1713 = vsub.s32 %v1710, %v1712
    %v1714 = vrot.slane %v1706, %v1713
    %v1716 = vunpack.c.l.s4 1934713408
    %v1717 = vunpack.c.0.s8 %v1716
    %v1718 = vlaneseq
    %v1719 = vshrl.u32 %v1718, 7
    %v1720 = vsub.s32 %v1717, %v1719
    %v1721 = vrot.slane %v1707, %v1720
    %v1722 = vcombine.high %v1714, 0
    %v1723 = vcombine.high %v1721, 0
    %v1724 = vpack.c.bf16 %v1525, %v1525
    %v1726 = vunpack.c.l.s4 1983009808
    %v1727 = vunpack.c.0.s8 %v1726
    %v1728 = vlaneseq
    %v1729 = vshrl.u32 %v1728, 7
    %v1730 = vsub.s32 %v1727, %v1729
    %v1731 = vrot.slane %v1724, %v1730
    %v1732 = vpack.c.bf16 %v1617, %v1617
    %v1734 = vunpack.c.l.s4 1983009808
    %v1735 = vunpack.c.0.s8 %v1734
    %v1736 = vlaneseq
    %v1737 = vshrl.u32 %v1736, 7
    %v1738 = vsub.s32 %v1735, %v1737
    %v1739 = vrot.slane %v1732, %v1738
    %v1740 = vcombine.low %v1731, %v1739
    %v1741 = vcombine.high %v1731, %v1739
    %v1743 = vunpack.c.l.s4 1934713408
    %v1744 = vunpack.c.0.s8 %v1743
    %v1745 = vlaneseq
    %v1746 = vshrl.u32 %v1745, 7
    %v1747 = vsub.s32 %v1744, %v1746
    %v1748 = vrot.slane %v1740, %v1747
    %v1750 = vunpack.c.l.s4 1934713408
    %v1751 = vunpack.c.0.s8 %v1750
    %v1752 = vlaneseq
    %v1753 = vshrl.u32 %v1752, 7
    %v1754 = vsub.s32 %v1751, %v1753
    %v1755 = vrot.slane %v1741, %v1754
    %v1756 = vcombine.high %v1748, 0
    %v1757 = vcombine.high %v1755, 0
    %v1760 = vpack.i.b16 %v1680, %v1646
    %v1762 = vshrl.u32 %v1646, 16
    %v1763 = vshrl.u32 %v1680, 16
    %v1764 = vpack.i.b16 %v1763, %v1762
    %v1768 = vpack.i.b16 %v1688, %v1654
    %v1770 = vshrl.u32 %v1654, 16
    %v1771 = vshrl.u32 %v1688, 16
    %v1772 = vpack.i.b16 %v1771, %v1770
    %v1776 = vpack.i.b16 %v1687, %v1653
    %v1778 = vshrl.u32 %v1653, 16
    %v1779 = vshrl.u32 %v1687, 16
    %v1780 = vpack.i.b16 %v1779, %v1778
    %v1784 = vpack.i.b16 %v1689, %v1655
    %v1786 = vshrl.u32 %v1655, 16
    %v1787 = vshrl.u32 %v1689, 16
    %v1788 = vpack.i.b16 %v1787, %v1786
    %v1792 = vpack.i.b16 %v1748, %v1714
    %v1794 = vshrl.u32 %v1714, 16
    %v1795 = vshrl.u32 %v1748, 16
    %v1796 = vpack.i.b16 %v1795, %v1794
    %v1800 = vpack.i.b16 %v1756, %v1722
    %v1802 = vshrl.u32 %v1722, 16
    %v1803 = vshrl.u32 %v1756, 16
    %v1804 = vpack.i.b16 %v1803, %v1802
    %v1808 = vpack.i.b16 %v1755, %v1721
    %v1810 = vshrl.u32 %v1721, 16
    %v1811 = vshrl.u32 %v1755, 16
    %v1812 = vpack.i.b16 %v1811, %v1810
    %v1816 = vpack.i.b16 %v1757, %v1723
    %v1818 = vshrl.u32 %v1723, 16
    %v1819 = vshrl.u32 %v1757, 16
    %v1820 = vpack.i.b16 %v1819, %v1818
    %v1822 = vcombine.low %v1760, %v1776
    %v1824 = vunpack.c.l.s4 1983009808
    %v1825 = vunpack.c.0.s8 %v1824
    %v1826 = vlaneseq
    %v1827 = vshrl.u32 %v1826, 7
    %v1828 = vsub.s32 %v1825, %v1827
    %v1829 = vrot.slane %v1822, %v1828
    %v1830 = vcombine.low %v1768, %v1784
    %v1832 = vunpack.c.l.s4 1983009808
    %v1833 = vunpack.c.0.s8 %v1832
    %v1834 = vlaneseq
    %v1835 = vshrl.u32 %v1834, 7
    %v1836 = vsub.s32 %v1833, %v1835
    %v1837 = vrot.slane %v1830, %v1836
    %v1838 = vcombine.low %v1792, %v1808
    %v1840 = vunpack.c.l.s4 1983009808
    %v1841 = vunpack.c.0.s8 %v1840
    %v1842 = vlaneseq
    %v1843 = vshrl.u32 %v1842, 7
    %v1844 = vsub.s32 %v1841, %v1843
    %v1845 = vrot.slane %v1838, %v1844
    %v1846 = vcombine.low %v1800, %v1816
    %v1848 = vunpack.c.l.s4 1983009808
    %v1849 = vunpack.c.0.s8 %v1848
    %v1850 = vlaneseq
    %v1851 = vshrl.u32 %v1850, 7
    %v1852 = vsub.s32 %v1849, %v1851
    %v1853 = vrot.slane %v1846, %v1852
    %v1854 = vcombine.low %v1829, %v1837
    %v1856 = vunpack.c.l.s4 1934713408
    %v1857 = vunpack.c.0.s8 %v1856
    %v1858 = vlaneseq
    %v1859 = vshrl.u32 %v1858, 7
    %v1860 = vsub.s32 %v1857, %v1859
    %v1861 = vrot.slane %v1854, %v1860
    %v1862 = vcombine.low %v1845, %v1853
    %v1864 = vunpack.c.l.s4 1934713408
    %v1865 = vunpack.c.0.s8 %v1864
    %v1866 = vlaneseq
    %v1867 = vshrl.u32 %v1866, 7
    %v1868 = vsub.s32 %v1865, %v1867
    %v1869 = vrot.slane %v1862, %v1868
    %v1870 = vcombine.low %v1861, %v1869
    %v1871 = vcombine.high %v1861, %v1869
    %v1872 = vcombine.low %v1764, %v1780
    %v1874 = vunpack.c.l.s4 1983009808
    %v1875 = vunpack.c.0.s8 %v1874
    %v1876 = vlaneseq
    %v1877 = vshrl.u32 %v1876, 7
    %v1878 = vsub.s32 %v1875, %v1877
    %v1879 = vrot.slane %v1872, %v1878
    %v1880 = vcombine.low %v1772, %v1788
    %v1882 = vunpack.c.l.s4 1983009808
    %v1883 = vunpack.c.0.s8 %v1882
    %v1884 = vlaneseq
    %v1885 = vshrl.u32 %v1884, 7
    %v1886 = vsub.s32 %v1883, %v1885
    %v1887 = vrot.slane %v1880, %v1886
    %v1888 = vcombine.low %v1796, %v1812
    %v1890 = vunpack.c.l.s4 1983009808
    %v1891 = vunpack.c.0.s8 %v1890
    %v1892 = vlaneseq
    %v1893 = vshrl.u32 %v1892, 7
    %v1894 = vsub.s32 %v1891, %v1893
    %v1895 = vrot.slane %v1888, %v1894
    %v1896 = vcombine.low %v1804, %v1820
    %v1898 = vunpack.c.l.s4 1983009808
    %v1899 = vunpack.c.0.s8 %v1898
    %v1900 = vlaneseq
    %v1901 = vshrl.u32 %v1900, 7
    %v1902 = vsub.s32 %v1899, %v1901
    %v1903 = vrot.slane %v1896, %v1902
    %v1904 = vcombine.low %v1879, %v1887
    %v1906 = vunpack.c.l.s4 1934713408
    %v1907 = vunpack.c.0.s8 %v1906
    %v1908 = vlaneseq
    %v1909 = vshrl.u32 %v1908, 7
    %v1910 = vsub.s32 %v1907, %v1909
    %v1911 = vrot.slane %v1904, %v1910
    %v1912 = vcombine.low %v1895, %v1903
    %v1914 = vunpack.c.l.s4 1934713408
    %v1915 = vunpack.c.0.s8 %v1914
    %v1916 = vlaneseq
    %v1917 = vshrl.u32 %v1916, 7
    %v1918 = vsub.s32 %v1915, %v1917
    %v1919 = vrot.slane %v1912, %v1918
    %v1920 = vcombine.low %v1911, %v1919
    %v1921 = vcombine.high %v1911, %v1919
    %v1924 = vpack.i.b16 %v1920, %v1870
    %v1925 = vshrl.u32 %v1870, 16
    %v1926 = vshrl.u32 %v1920, 16
    %v1927 = vpack.i.b16 %v1926, %v1925
    %v1930 = vpack.i.b16 %v1921, %v1871
    %v1931 = vshrl.u32 %v1871, 16
    %v1932 = vshrl.u32 %v1921, 16
    %v1933 = vpack.i.b16 %v1932, %v1931
    %1934 = vrot.lane.b32.xlu0 %v1927, 16
    %v1935 = vpop.permute.xlu0 %1934
    %1936 = vrot.lane.b32.xlu0 %v1930, 32
    %v1937 = vpop.permute.xlu0 %1936
    %1938 = vrot.lane.b32.xlu0 %v1933, 48
    %v1939 = vpop.permute.xlu0 %1938
    %v1942 = vsel %vm779, %v1924, %v1935
    %v1944 = vsel %vm78, %v1942, %v1937
    %vm1945 = vcmask 392192
    %v1947 = vsel %vm1945, %v1944, %v1939
    %v1948 = vld [vmem:[%s2] sm:$0xf]
    %v1949 = vld [vmem:[%s2 + $0x4] sm:$0xf]
    %v1950 = vld [vmem:[%s2 + $0x8] sm:$0xf]
    %v1951 = vld [vmem:[%s2 + $0xc] sm:$0xf]
    %v1952 = vld [vmem:[%s2 + $0x10] sm:$0xf]
    %v1953 = vld [vmem:[%s2 + $0x14] sm:$0xf]
    %v1954 = vld [vmem:[%s2 + $0x18] sm:$0xf]
    %v1955 = vld [vmem:[%s2 + $0x1c] sm:$0xf]
    %v1956 = vld [vmem:[%s5 + $0x1] ss:$0 sm:$0xff]
    %v1965 = vunpack.c.l.b16 %v1948
    %v1966 = vunpack.c.l.b16 %v1949
    %v1967 = vunpack.c.l.b16 %v1950
    %v1968 = vunpack.c.l.b16 %v1951
    %v1969 = vunpack.c.l.b16 %v1952
    %v1970 = vunpack.c.l.b16 %v1953
    %v1971 = vunpack.c.l.b16 %v1954
    %v1972 = vunpack.c.l.b16 %v1955
    %v1973 = vpack.c.b16 %v1966, %v1965
    %v1974 = vpack.c.b16 %v1968, %v1967
    %v1975 = vpack.c.b16 %v1970, %v1969
    %v1976 = vpack.c.b16 %v1972, %v1971
    %vm1981 = vcmask 523264
    %v1982 = vsel %vm1981, %v1947, 0
    %1984 = vmatprep.subr.bf16.mxu0 0
    %1985 = vmatpush1.bf16.msra.mxu0 %v1973
    %1986 = vmatprep.subr.bf16.mxu0 0
    %1987 = vmatpush1.bf16.msra.mxu0 %v1974
    %1988 = vmatprep.subr.bf16.mxu0 0
    %1989 = vmatpush1.bf16.msra.mxu0 %v1975
    %1990 = vmatprep.subr.bf16.mxu0 0
    %1991 = vmatpush1.bf16.msra.mxu0 %v1976
    %1992 = vmatprep.subr.bf16.mxu0 0
    %1993 = vmatpush1.bf16.msra.mxu0 0
    %1994 = vmatprep.subr.bf16.mxu0 0
    %1995 = vmatpush1.bf16.msra.mxu0 0
    %1996 = vmatprep.subr.bf16.mxu0 0
    %1997 = vmatpush1.bf16.msra.mxu0 0
    %1998 = vmatprep.subr.bf16.mxu0 0
    %1999 = vmatpush1.bf16.msra.mxu0 0
    %2000 = vmatprep.subr.bf16.mxu0 0
    %2001 = vmatpush1.bf16.msra.mxu0 0
    %2002 = vmatprep.subr.bf16.mxu0 0
    %2003 = vmatpush1.bf16.msra.mxu0 0
    %2004 = vmatprep.subr.bf16.mxu0 0
    %2005 = vmatpush1.bf16.msra.mxu0 0
    %2006 = vmatprep.subr.bf16.mxu0 0
    %2007 = vmatpush1.bf16.msra.mxu0 0
    %2008 = vmatprep.subr.bf16.mxu0 0
    %2009 = vmatpush1.bf16.msra.mxu0 0
    %2010 = vmatprep.subr.bf16.mxu0 0
    %2011 = vmatpush1.bf16.msra.mxu0 0
    %2012 = vmatprep.subr.bf16.mxu0 0
    %2013 = vmatpush1.bf16.msra.mxu0 0
    %2014 = vmatprep.subr.bf16.mxu0 0
    %2015 = vmatpush1.bf16.msra.mxu0 0
    %2016 = vmatprep.mubr.bf16.mxu0 0
    %2017 = vmatmul.mubr.bf16.gmra.mrb[0].mxu0 %v1982
    %v2018 = vpop.f32.mrb[0].mxu0
    %v2019 = vadd.f32 %v1956, %v2018
    %v2020 = vpop.f32.mrb[0].mxu0
    %v2021 = vpop.f32.mrb[0].mxu0
    %v2022 = vadd.f32 %v1956, %v2021
    %v2023 = vpop.f32.mrb[0].mxu0
    %2024 = vdwg.mxu0
    %v2025 = vadd.f32 %v39, %v2019
    %v2026 = vadd.f32 %v40, %v2022
    %v2027 = vld [vmem:[%s5 + $0x2] ss:$0 sm:$0xff]
    %v2028 = vld [vmem:[%s5 + $0x3] ss:$0 sm:$0xff]
    %v2029 = vsel %vm78, %v2025, 0.0
    %2030 = vadd.xlane.f32.xlu0 %v2029
    %v2031 = vpop.xlane.xlu0 %2030
    %v2032 = vsel %vm78, %v2026, 0.0
    %2033 = vadd.xlane.f32.xlu0 %v2032
    %v2034 = vpop.xlane.xlu0 %2033
    %v2035 = vmul.f32 %v2025, %v2025
    %v2036 = vmul.f32 %v2026, %v2026
    %v2037 = vsel %vm78, %v2035, 0.0
    %2038 = vadd.xlane.f32.xlu0 %v2037
    %v2039 = vpop.xlane.xlu0 %2038
    %v2040 = vsel %vm78, %v2036, 0.0
    %2041 = vadd.xlane.f32.xlu0 %v2040
    %v2042 = vpop.xlane.xlu0 %2041
    %v2043 = vmul.f32 %v2031, 0.03125
    %v2044 = vmul.f32 %v2034, 0.03125
    %v2045 = vmul.f32 %v2039, 0.03125
    %v2046 = vmul.f32 %v2042, 0.03125
    %v2047 = vmul.f32 %v2043, %v2043
    %v2048 = vmul.f32 %v2044, %v2044
    %v2049 = vsub.f32 %v2045, %v2047
    %v2050 = vsub.f32 %v2046, %v2048
    %v2051 = vmax.f32 %v2049, 0.0
    %v2052 = vmax.f32 %v2050, 0.0
    %v2053 = vsub.f32 %v2025, %v2043
    %v2054 = vsub.f32 %v2026, %v2044
    %v2055 = vadd.f32 %v2051, 1e-05
    %v2056 = vadd.f32 %v2052, 1e-05
    %v2057 = vrsqrt.pop %v2055
    %v2058 = vrsqrt.pop %v2056
    %v2059 = vmul.f32 %v2053, %v2057
    %v2060 = vmul.f32 %v2054, %v2058
    %v2061 = vmul.f32 %v2059, %v2027
    %v2062 = vmul.f32 %v2060, %v2027
    %v2063 = vadd.f32 %v2061, %v2028
    %v2064 = vadd.f32 %v2062, %v2028
    %v2065 = vpack.c.bf16 %v2064, %v2063
    %v2066 = vld [vmem:[%s3] sm:$0xf]
    %v2067 = vld [vmem:[%s3 + $0x4] sm:$0xf]
    %v2068 = vld [vmem:[%s3 + $0x8] sm:$0xf]
    %v2069 = vld [vmem:[%s3 + $0xc] sm:$0xf]
    %v2070 = vld [vmem:[%s5 + $0x4] ss:$0 sm:$0xff]
    %v2075 = vunpack.c.l.b16 %v2066
    %v2076 = vunpack.c.l.b16 %v2067
    %v2077 = vunpack.c.l.b16 %v2068
    %v2078 = vunpack.c.l.b16 %v2069
    %v2079 = vpack.c.b16 %v2076, %v2075
    %v2080 = vpack.c.b16 %v2078, %v2077
    %v2084 = vsel %vm78, %v2065, 0
    %2086 = vmatprep.subr.bf16.mxu0 0
    %2087 = vmatpush1.bf16.msra.mxu0 %v2079
    %2088 = vmatprep.subr.bf16.mxu0 0
    %2089 = vmatpush1.bf16.msra.mxu0 %v2080
    %2090 = vmatprep.subr.bf16.mxu0 0
    %2091 = vmatpush1.bf16.msra.mxu0 0
    %2092 = vmatprep.subr.bf16.mxu0 0
    %2093 = vmatpush1.bf16.msra.mxu0 0
    %2094 = vmatprep.subr.bf16.mxu0 0
    %2095 = vmatpush1.bf16.msra.mxu0 0
    %2096 = vmatprep.subr.bf16.mxu0 0
    %2097 = vmatpush1.bf16.msra.mxu0 0
    %2098 = vmatprep.subr.bf16.mxu0 0
    %2099 = vmatpush1.bf16.msra.mxu0 0
    %2100 = vmatprep.subr.bf16.mxu0 0
    %2101 = vmatpush1.bf16.msra.mxu0 0
    %2102 = vmatprep.subr.bf16.mxu0 0
    %2103 = vmatpush1.bf16.msra.mxu0 0
    %2104 = vmatprep.subr.bf16.mxu0 0
    %2105 = vmatpush1.bf16.msra.mxu0 0
    %2106 = vmatprep.subr.bf16.mxu0 0
    %2107 = vmatpush1.bf16.msra.mxu0 0
    %2108 = vmatprep.subr.bf16.mxu0 0
    %2109 = vmatpush1.bf16.msra.mxu0 0
    %2110 = vmatprep.subr.bf16.mxu0 0
    %2111 = vmatpush1.bf16.msra.mxu0 0
    %2112 = vmatprep.subr.bf16.mxu0 0
    %2113 = vmatpush1.bf16.msra.mxu0 0
    %2114 = vmatprep.subr.bf16.mxu0 0
    %2115 = vmatpush1.bf16.msra.mxu0 0
    %2116 = vmatprep.subr.bf16.mxu0 0
    %2117 = vmatpush1.bf16.msra.mxu0 0
    %2118 = vmatprep.mubr.bf16.mxu0 0
    %2119 = vmatmul.mubr.bf16.gmra.mrb[0].mxu0 %v2084
    %v2120 = vpop.f32.mrb[0].mxu0
    %v2121 = vadd.f32 %v2070, %v2120
    %v2122 = vpop.f32.mrb[0].mxu0
    %v2123 = vpop.f32.mrb[0].mxu0
    %v2124 = vadd.f32 %v2070, %v2123
    %v2125 = vpop.f32.mrb[0].mxu0
    %2126 = vdwg.mxu0
    %v2127 = vmax.f32 %v2121, 0.0
    %v2128 = vmax.f32 %v2124, 0.0
    %v2129 = vpack.c.bf16 %v2128, %v2127
    %v2130 = vld [vmem:[#allocation2] sm:$0xf]
    %v2131 = vld [vmem:[#allocation2 + $0x4] sm:$0xf]
    %v2132 = vld [vmem:[%s5 + $0x5] ss:$0 sm:$0xff]
    %v2135 = vunpack.c.l.b16 %v2130
    %v2136 = vunpack.c.l.b16 %v2131
    %v2137 = vpack.c.b16 %v2136, %v2135
    %v2140 = vsel %vm779, %v2129, 0
    %2142 = vmatprep.subr.bf16.mxu0 0
    %2143 = vmatpush1.bf16.msra.mxu0 %v2137
    %2144 = vmatprep.subr.bf16.mxu0 0
    %2145 = vmatpush1.bf16.msra.mxu0 0
    %2146 = vmatprep.subr.bf16.mxu0 0
    %2147 = vmatpush1.bf16.msra.mxu0 0
    %2148 = vmatprep.subr.bf16.mxu0 0
    %2149 = vmatpush1.bf16.msra.mxu0 0
    %2150 = vmatprep.subr.bf16.mxu0 0
    %2151 = vmatpush1.bf16.msra.mxu0 0
    %2152 = vmatprep.subr.bf16.mxu0 0
    %2153 = vmatpush1.bf16.msra.mxu0 0
    %2154 = vmatprep.subr.bf16.mxu0 0
    %2155 = vmatpush1.bf16.msra.mxu0 0
    %2156 = vmatprep.subr.bf16.mxu0 0
    %2157 = vmatpush1.bf16.msra.mxu0 0
    %2158 = vmatprep.subr.bf16.mxu0 0
    %2159 = vmatpush1.bf16.msra.mxu0 0
    %2160 = vmatprep.subr.bf16.mxu0 0
    %2161 = vmatpush1.bf16.msra.mxu0 0
    %2162 = vmatprep.subr.bf16.mxu0 0
    %2163 = vmatpush1.bf16.msra.mxu0 0
    %2164 = vmatprep.subr.bf16.mxu0 0
    %2165 = vmatpush1.bf16.msra.mxu0 0
    %2166 = vmatprep.subr.bf16.mxu0 0
    %2167 = vmatpush1.bf16.msra.mxu0 0
    %2168 = vmatprep.subr.bf16.mxu0 0
    %2169 = vmatpush1.bf16.msra.mxu0 0
    %2170 = vmatprep.subr.bf16.mxu0 0
    %2171 = vmatpush1.bf16.msra.mxu0 0
    %2172 = vmatprep.subr.bf16.mxu0 0
    %2173 = vmatpush1.bf16.msra.mxu0 0
    %2174 = vmatprep.mubr.bf16.mxu0 0
    %2175 = vmatmul.mubr.bf16.gmra.mrb[0].mxu0 %v2140
    %v2176 = vpop.f32.mrb[0].mxu0
    %v2177 = vadd.f32 %v2132, %v2176
    %v2178 = vpop.f32.mrb[0].mxu0
    %v2179 = vpop.f32.mrb[0].mxu0
    %v2180 = vadd.f32 %v2132, %v2179
    %v2181 = vpop.f32.mrb[0].mxu0
    %2182 = vdwg.mxu0
    %v2183 = vadd.f32 %v2063, %v2177
    %v2184 = vadd.f32 %v2064, %v2180
    %v2185 = vld [vmem:[%s5 + $0x6] ss:$0 sm:$0xff]
    %v2186 = vld [vmem:[%s5 + $0x7] ss:$0 sm:$0xff]
    %v2187 = vsel %vm78, %v2183, 0.0
    %2188 = vadd.xlane.f32.xlu0 %v2187
    %v2189 = vpop.xlane.xlu0 %2188
    %v2190 = vsel %vm78, %v2184, 0.0
    %2191 = vadd.xlane.f32.xlu0 %v2190
    %v2192 = vpop.xlane.xlu0 %2191
    %v2193 = vmul.f32 %v2183, %v2183
    %v2194 = vmul.f32 %v2184, %v2184
    %v2195 = vsel %vm78, %v2193, 0.0
    %2196 = vadd.xlane.f32.xlu0 %v2195
    %v2197 = vpop.xlane.xlu0 %2196
    %v2198 = vsel %vm78, %v2194, 0.0
    %2199 = vadd.xlane.f32.xlu0 %v2198
    %v2200 = vpop.xlane.xlu0 %2199
    %v2201 = vmul.f32 %v2189, 0.03125
    %v2202 = vmul.f32 %v2192, 0.03125
    %v2203 = vmul.f32 %v2197, 0.03125
    %v2204 = vmul.f32 %v2200, 0.03125
    %v2205 = vmul.f32 %v2201, %v2201
    %v2206 = vmul.f32 %v2202, %v2202
    %v2207 = vsub.f32 %v2203, %v2205
    %v2208 = vsub.f32 %v2204, %v2206
    %v2209 = vmax.f32 %v2207, 0.0
    %v2210 = vmax.f32 %v2208, 0.0
    %v2211 = vsub.f32 %v2183, %v2201
    %v2212 = vsub.f32 %v2184, %v2202
    %v2213 = vadd.f32 %v2209, 1e-05
    %v2214 = vadd.f32 %v2210, 1e-05
    %v2215 = vrsqrt.pop %v2213
    %v2216 = vrsqrt.pop %v2214
    %v2217 = vmul.f32 %v2211, %v2215
    %v2218 = vmul.f32 %v2212, %v2216
    %v2219 = vmul.f32 %v2217, %v2185
    %v2220 = vmul.f32 %v2218, %v2185
    %v2221 = vadd.f32 %v2219, %v2186
    %v2222 = vadd.f32 %v2220, %v2186
    %2223 = vst.msk [vmem:[#allocation5] sm:$0xff] %vm78, %v2221
    %2224 = vst.msk [vmem:[#allocation5 + $0x8] sm:$0xff] %vm78, %v2222
    // Predicated region
    $region30: #{tpu_custom_call.1} parent=1 // pred_check
      _
    $region31: #{tpu_custom_call.1} parent=1 // pred_check_branch
      %2226 = sbr.rel (0) target = $region33
    $region32: #{tpu_custom_call.1} parent=1 // pred_region
      %s2228 = ssub.s32 256, 256
      %2229 = vsyncadd [#allocation4], %s2228
      %s2230 = sshll.u32 [#allocation5], 4
      %s2231 = int_to_ptr.vmem [resolvable:$true] %s2230
      %2236 = dma.vmem_to_hbm [thread:$0]  %s2231, 256, %s6, [#allocation4], 128, 128, 8
    $region33: #{tpu_custom_call.1} parent=1 // pred_fallthru
      _
    // Predicated region
    $region34: #{tpu_custom_call.1} parent=1 // pred_check
      _
    $region35: #{tpu_custom_call.1} parent=1 // pred_check_branch
      %2238 = sbr.rel (0) target = $region37
    $region36: #{tpu_custom_call.1} parent=1 // pred_region
      %2239 = dma.done [#allocation4], 256
    $region37: #{tpu_custom_call.1} parent=1 // pred_fallthru
      _
    %2240 = vsyncpa [#allocation3], 1
    %2241 = vsyncpa [#allocation4], 1

</llo_original>
